<compile_context>
chip_gen: v7x
topology: tpu7x:2x2x1
jax: 0.10.0
libtpu: 0.0.40
codegen_flags: <defaults>
</compile_context>

<pallas_src>
from functools import partial

import jax
import jax.numpy as jnp
from jax.experimental import pallas as pl
from jax.experimental.pallas import tpu as pltpu

LANE = 128


def _round_up(n, m):
    return ((n + m - 1) // m) * m


def _bn_norm(x, eps=1e-5):
    """Training-mode BatchNorm1d normalization, no affine, single pass.

    var = E[x^2] - mean^2 (slightly less stable than two-pass; fine at these
    scales with eps=1e-5)."""
    n = x.shape[0]
    s = jnp.sum(x, axis=0, keepdims=True)
    sq = jnp.sum(x * x, axis=0, keepdims=True)
    mean = s * (1.0 / n)
    var = sq * (1.0 / n) - mean * mean
    return (x - mean) * jax.lax.rsqrt(var + eps)


# ----------------------------- fused Pallas kernel -----------------------------

def _gin_net_kernel(x_ref, adj_ref, pool_ref,
                    w_feat, b_feat,
                    c_w1, c_bng, c_bnb, c_w2, c_b2,
                    f_w, f_b,
                    w_cls, b_cls,
                    out_ref,
                    *, num_conv_layers, num_fc_layers, num_classes):
    f32 = jnp.float32
    bf16 = jnp.bfloat16

    # ---- bn_feat (affine folded into conv_feat) -> conv_feat -> relu ----
    h = _bn_norm(x_ref[...])                                   # f32 elementwise
    h = jnp.dot(h.astype(bf16), w_feat[...],
                preferred_element_type=f32) + b_feat[...]
    h = jnp.maximum(h, 0.0)

    # ---- GIN conv stack: h <- MLP( (A + (1+eps) I) @ h ), eps = 0 ----
    # adjacency / activations fed to the MXU in bf16 (adj entries are small
    # exact integers), accumulation in f32.
    adj_bf = adj_ref[...]                                      # already bf16
    for i in range(num_conv_layers):
        agg = jnp.dot(adj_bf, h.astype(bf16), preferred_element_type=f32)
        # Linear #1: bias dropped — cancelled by the training-mode BN that follows.
        z = jnp.dot(agg.astype(bf16), c_w1[i], preferred_element_type=f32)
        z = jnp.maximum(_bn_norm(z) * c_bng[i] + c_bnb[i], 0.0)
        z = jnp.dot(z.astype(bf16), c_w2[i], preferred_element_type=f32) + c_b2[i]
        h = jnp.maximum(z, 0.0)

    # ---- global_add_pool as one-hot matmul (pool already bf16) ----
    g = jnp.dot(pool_ref[...], h.astype(bf16), preferred_element_type=f32)

    # ---- FC stack: bn (affine folded into the Linear) -> relu(Linear) ----
    for i in range(num_fc_layers - 1):
        g = _bn_norm(g)
        g = jnp.maximum(
            jnp.dot(g.astype(bf16), f_w[i], preferred_element_type=f32) + f_b[i],
            0.0)

    # ---- bn_hidden (folded) -> lin_class -> masked log_softmax epilogue ----
    g = _bn_norm(g)
    logits = jnp.dot(g.astype(bf16), w_cls[...],
                     preferred_element_type=f32) + b_cls[...]

    col = jax.lax.broadcasted_iota(jnp.int32, logits.shape, dimension=1)
    valid = col < num_classes
    lm = jnp.where(valid, logits, jnp.full_like(logits, -1e30))
    m = jnp.max(lm, axis=-1, keepdims=True)
    s = lm - m
    e = jnp.where(valid, jnp.exp(s), 0.0)
    lse = jnp.log(jnp.sum(e, axis=-1, keepdims=True))
    out_ref[...] = jnp.where(valid, s - lse, 0.0)


# ----------------------------- plain-JAX glue -----------------------------

def gin_aggregation_matrix(edge_index, num_nodes, eps=0.0):
    """Dense GIN aggregation operator: A + (1+eps) I, with A[i,j] = #edges j->i.

    Returned as bf16: entries are small exact integers, halves VMEM/DMA bytes
    and feeds the MXU natively."""
    src, dst = edge_index[0], edge_index[1]
    adj = jnp.zeros((num_nodes, num_nodes), jnp.float32).at[dst, src].add(1.0)
    adj = adj + (1.0 + eps) * jnp.eye(num_nodes, dtype=jnp.float32)
    return adj.astype(jnp.bfloat16)


def pooling_matrix(batch, num_graphs):
    """P[g, n] = 1 if node n belongs to graph g (global_add_pool = P @ X), bf16."""
    return (batch[None, :] == jnp.arange(num_graphs)[:, None]).astype(jnp.bfloat16)


def init_params(key, num_features, num_classes, hidden,
                num_conv_layers=3, num_fc_layers=2):
    """Parameters pre-padded to lane-dense [*, 128k] shapes, BN-affine folds
    applied, all Linear weights stored bf16 (biases / BN params stay f32)."""
    Fp = _round_up(num_features, LANE)
    Hp = _round_up(hidden, LANE)
    Cp = _round_up(num_classes, LANE)
    bf16 = jnp.bfloat16

    def pad2(a, rows, cols):
        return jnp.zeros((rows, cols), jnp.float32).at[:a.shape[0], :a.shape[1]].set(a)

    def linear_init(k, fan_in, fan_out, rows, cols):
        # torch.nn.Linear default: U(-1/sqrt(fan_in), 1/sqrt(fan_in))
        lim = 1.0 / float(fan_in) ** 0.5
        kw, kb = jax.random.split(k)
        w = jax.random.uniform(kw, (fan_in, fan_out), jnp.float32, -lim, lim)
        b = jax.random.uniform(kb, (1, fan_out), jnp.float32, -lim, lim)
        return pad2(w, rows, cols), pad2(b, 1, cols)

    def glorot_init(k, fan_in, fan_out, rows, cols):
        lim = (6.0 / (fan_in + fan_out)) ** 0.5
        w = jax.random.uniform(k, (fan_in, fan_out), jnp.float32, -lim, lim)
        return pad2(w, rows, cols)

    def bn_init(real, padded):
        # module init: BatchNorm1d weight=1, bias=1e-4; padded channels zeroed
        g = jnp.zeros((1, padded), jnp.float32).at[:, :real].set(1.0)
        b = jnp.zeros((1, padded), jnp.float32).at[:, :real].set(1e-4)
        return g, b

    def fold_bn_into_linear(gamma, beta, w, b=None):
        # BN_affine(xhat) @ W + b == xhat @ (diag(gamma) @ W) + (beta @ W + b)
        w_f = w * gamma.reshape(-1, 1)
        b_f = beta @ w
        if b is not None:
            b_f = b_f + b
        return w_f, b_f

    n_keys = 1 + 2 * num_conv_layers + (num_fc_layers - 1) + 1
    keys = iter(jax.random.split(key, n_keys))

    # bn_feat affine folded into conv_feat (gfn=True: plain linear, no bias)
    bnf_g, bnf_b = bn_init(num_features, Fp)
    w_feat = glorot_init(next(keys), num_features, hidden, Fp, Hp)
    w_feat, b_feat = fold_bn_into_linear(bnf_g, bnf_b, w_feat, None)

    # GIN conv MLPs: Linear(no-bias-needed, BN cancels it) -> BN -> ReLU -> Linear -> ReLU
    w1s, gs, bs, w2s, b2s = [], [], [], [], []
    for _ in range(num_conv_layers):
        w1, _unused_b1 = linear_init(next(keys), hidden, hidden, Hp, Hp)
        w2, b2 = linear_init(next(keys), hidden, hidden, Hp, Hp)
        g, b = bn_init(hidden, Hp)
        w1s.append(w1); w2s.append(w2); b2s.append(b2); gs.append(g); bs.append(b)

    # FC stack: fc-BN affine folded into the fc Linear
    fws, fbs = [], []
    for _ in range(num_fc_layers - 1):
        g, b = bn_init(hidden, Hp)
        w, bias = linear_init(next(keys), hidden, hidden, Hp, Hp)
        w, bias = fold_bn_into_linear(g, b, w, bias)
        fws.append(w); fbs.append(bias)

    # bn_hidden affine folded into lin_class
    bnh_g, bnh_b = bn_init(hidden, Hp)
    w_cls, b_cls = linear_init(next(keys), hidden, num_classes, Hp, Cp)
    w_cls, b_cls = fold_bn_into_linear(bnh_g, bnh_b, w_cls, b_cls)

    return {
        "config": dict(num_features=num_features, num_classes=num_classes,
                       hidden=hidden, num_conv_layers=num_conv_layers,
                       num_fc_layers=num_fc_layers, f_pad=Fp, h_pad=Hp, c_pad=Cp),
        "conv_feat_w": w_feat.astype(bf16), "conv_feat_b": b_feat,
        "conv_w1": jnp.stack(w1s).astype(bf16),
        "conv_bn_g": jnp.stack(gs), "conv_bn_b": jnp.stack(bs),
        "conv_w2": jnp.stack(w2s).astype(bf16), "conv_b2": jnp.stack(b2s),
        "fc_w": jnp.stack(fws).astype(bf16), "fc_b": jnp.stack(fbs),
        "lin_class_w": w_cls.astype(bf16), "lin_class_b": b_cls,
    }


def gin_forward(params, x, edge_index, batch, num_graphs):
    cfg = params["config"]
    N, F = x.shape
    Fp, Cp = cfg["f_pad"], cfg["c_pad"]
    num_classes = cfg["num_classes"]

    # one-time graph-structure / input prep (bf16 MXU operands, f32 features)
    adj = gin_aggregation_matrix(edge_index, N)          # (A + I), [N, N] bf16
    pool = pooling_matrix(batch, num_graphs)             # [G, N] bf16
    x_pad = jnp.zeros((N, Fp), jnp.float32).at[:, :F].set(x.astype(jnp.float32))

    vmem = pl.BlockSpec(memory_space=pltpu.MemorySpace.VMEM)
    kernel = partial(_gin_net_kernel,
                     num_conv_layers=cfg["num_conv_layers"],
                     num_fc_layers=cfg["num_fc_layers"],
                     num_classes=num_classes)

    out = pl.pallas_call(
        kernel,
        out_shape=jax.ShapeDtypeStruct((num_graphs, Cp), jnp.float32),
        in_specs=[vmem] * 14,
        out_specs=vmem,
        compiler_params=pltpu.CompilerParams(
            # above every generation's default scoped limit, below v7x's 64 MiB
            vmem_limit_bytes=48 * 1024 * 1024),
    )(x_pad, adj, pool,
      params["conv_feat_w"], params["conv_feat_b"],
      params["conv_w1"], params["conv_bn_g"], params["conv_bn_b"],
      params["conv_w2"], params["conv_b2"],
      params["fc_w"], params["fc_b"],
      params["lin_class_w"], params["lin_class_b"])

    return out[:, :num_classes]


# ----------------------------------- main -----------------------------------

if __name__ == "__main__":
    num_features, num_classes, hidden = 8, 4, 32
    nodes_per_graph, num_graphs = 8, 2
    num_nodes = nodes_per_graph * num_graphs

    key = jax.random.PRNGKey(0)
    k_x, k_p = jax.random.split(key)

    # node features [N, F]
    x = jax.random.normal(k_x, (num_nodes, num_features), jnp.float32)

    # two ring graphs, undirected (both directions) -> edge_index [2, 32]
    src, dst = [], []
    for g in range(num_graphs):
        base = g * nodes_per_graph
        for i in range(nodes_per_graph):
            a, b = base + i, base + (i + 1) % nodes_per_graph
            src += [a, b]
            dst += [b, a]
    edge_index = jnp.array([src, dst], dtype=jnp.int32)
    batch = jnp.repeat(jnp.arange(num_graphs, dtype=jnp.int32), nodes_per_graph)

    params = init_params(k_p, num_features, num_classes, hidden)

    out = gin_forward(params, x, edge_index, batch, num_graphs)
    out = jax.block_until_ready(out)

    assert out.shape == (num_graphs, num_classes)
    assert bool(jnp.all(jnp.isfinite(out)))
    # log-softmax rows must exponentiate-sum to 1
    assert bool(jnp.all(jnp.abs(jnp.sum(jnp.exp(out), axis=-1) - 1.0) < 1e-3))
    print("KERNEL_OK")
</pallas_src>

<mosaic_0001>
module attributes {stable_mosaic.version = 11 : i64} {
  func.func @_gin_net_kernel(%arg0: memref<16x128xf32, #tpu.memory_space<vmem>>, %arg1: memref<16x16xbf16, #tpu.memory_space<vmem>>, %arg2: memref<2x16xbf16, #tpu.memory_space<vmem>>, %arg3: memref<128x128xbf16, #tpu.memory_space<vmem>>, %arg4: memref<1x128xf32, #tpu.memory_space<vmem>>, %arg5: memref<3x128x128xbf16, #tpu.memory_space<vmem>>, %arg6: memref<3x1x128xf32, #tpu.memory_space<vmem>>, %arg7: memref<3x1x128xf32, #tpu.memory_space<vmem>>, %arg8: memref<3x128x128xbf16, #tpu.memory_space<vmem>>, %arg9: memref<3x1x128xf32, #tpu.memory_space<vmem>>, %arg10: memref<1x128x128xbf16, #tpu.memory_space<vmem>>, %arg11: memref<1x1x128xf32, #tpu.memory_space<vmem>>, %arg12: memref<128x128xbf16, #tpu.memory_space<vmem>>, %arg13: memref<1x128xf32, #tpu.memory_space<vmem>>, %arg14: memref<2x128xf32, #tpu.memory_space<vmem>>) attributes {dimension_semantics = [], scalar_prefetch = 0 : i64, scratch_operands = 0 : i64, tpu.core_type = #tpu.core_type<tc>} {
    %c0 = arith.constant 0 : index
    %c0_0 = arith.constant 0 : index
    %0 = vector.load %arg0[%c0, %c0_0] : memref<16x128xf32, #tpu.memory_space<vmem>>, vector<16x128xf32>
    %cst = arith.constant dense<0.000000e+00> : vector<128xf32>
    %1 = vector.multi_reduction <add>, %0, %cst [0] : vector<16x128xf32> to vector<128xf32>
    %2 = vector.shape_cast %1 : vector<128xf32> to vector<1x128xf32>
    %3 = arith.mulf %0, %0 : vector<16x128xf32>
    %cst_1 = arith.constant dense<0.000000e+00> : vector<128xf32>
    %4 = vector.multi_reduction <add>, %3, %cst_1 [0] : vector<16x128xf32> to vector<128xf32>
    %5 = vector.shape_cast %4 : vector<128xf32> to vector<1x128xf32>
    %cst_2 = arith.constant 6.250000e-02 : f32
    %6 = vector.broadcast %cst_2 : f32 to vector<1x128xf32>
    %7 = arith.mulf %2, %6 : vector<1x128xf32>
    %cst_3 = arith.constant 6.250000e-02 : f32
    %8 = vector.broadcast %cst_3 : f32 to vector<1x128xf32>
    %9 = arith.mulf %5, %8 : vector<1x128xf32>
    %10 = arith.mulf %7, %7 : vector<1x128xf32>
    %11 = arith.subf %9, %10 : vector<1x128xf32>
    %12 = vector.broadcast %7 : vector<1x128xf32> to vector<16x128xf32>
    %13 = arith.subf %0, %12 : vector<16x128xf32>
    %cst_4 = arith.constant 9.99999974E-6 : f32
    %14 = vector.broadcast %cst_4 : f32 to vector<1x128xf32>
    %15 = arith.addf %11, %14 : vector<1x128xf32>
    %16 = math.rsqrt %15 : vector<1x128xf32>
    %17 = vector.broadcast %16 : vector<1x128xf32> to vector<16x128xf32>
    %18 = arith.mulf %13, %17 : vector<16x128xf32>
    %19 = arith.truncf %18 : vector<16x128xf32> to vector<16x128xbf16>
    %c0_5 = arith.constant 0 : index
    %c0_6 = arith.constant 0 : index
    %20 = vector.load %arg3[%c0_5, %c0_6] : memref<128x128xbf16, #tpu.memory_space<vmem>>, vector<128x128xbf16>
    %cst_7 = arith.constant dense<0.000000e+00> : vector<16x128xf32>
    %21 = tpu.matmul %19, %20, %cst_7 {dimension_numbers = #tpu.dot_dimension_numbers<[1], [0], [0], [1], [0, 0, 1, 1], [], []>} : vector<16x128xbf16>, vector<128x128xbf16>, vector<16x128xf32> -> vector<16x128xf32>
    %c0_8 = arith.constant 0 : index
    %c0_9 = arith.constant 0 : index
    %22 = vector.load %arg4[%c0_8, %c0_9] : memref<1x128xf32, #tpu.memory_space<vmem>>, vector<1x128xf32>
    %23 = vector.broadcast %22 : vector<1x128xf32> to vector<16x128xf32>
    %24 = arith.addf %21, %23 : vector<16x128xf32>
    %cst_10 = arith.constant 0.000000e+00 : f32
    %25 = vector.broadcast %cst_10 : f32 to vector<16x128xf32>
    %26 = arith.maximumf %24, %25 : vector<16x128xf32>
    %c0_11 = arith.constant 0 : index
    %c0_12 = arith.constant 0 : index
    %27 = vector.load %arg1[%c0_11, %c0_12] : memref<16x16xbf16, #tpu.memory_space<vmem>>, vector<16x16xbf16>
    %28 = arith.truncf %26 : vector<16x128xf32> to vector<16x128xbf16>
    %cst_13 = arith.constant dense<0.000000e+00> : vector<16x128xf32>
    %29 = tpu.matmul %27, %28, %cst_13 {dimension_numbers = #tpu.dot_dimension_numbers<[1], [0], [0], [1], [0, 0, 1, 1], [], []>} : vector<16x16xbf16>, vector<16x128xbf16>, vector<16x128xf32> -> vector<16x128xf32>
    %30 = arith.truncf %29 : vector<16x128xf32> to vector<16x128xbf16>
    %c0_14 = arith.constant 0 : index
    %c0_15 = arith.constant 0 : index
    %c0_16 = arith.constant 0 : index
    %31 = vector.load %arg5[%c0_14, %c0_15, %c0_16] : memref<3x128x128xbf16, #tpu.memory_space<vmem>>, vector<1x128x128xbf16>
    %32 = vector.shape_cast %31 : vector<1x128x128xbf16> to vector<128x128xbf16>
    %cst_17 = arith.constant dense<0.000000e+00> : vector<16x128xf32>
    %33 = tpu.matmul %30, %32, %cst_17 {dimension_numbers = #tpu.dot_dimension_numbers<[1], [0], [0], [1], [0, 0, 1, 1], [], []>} : vector<16x128xbf16>, vector<128x128xbf16>, vector<16x128xf32> -> vector<16x128xf32>
    %cst_18 = arith.constant dense<0.000000e+00> : vector<128xf32>
    %34 = vector.multi_reduction <add>, %33, %cst_18 [0] : vector<16x128xf32> to vector<128xf32>
    %35 = vector.shape_cast %34 : vector<128xf32> to vector<1x128xf32>
    %36 = arith.mulf %33, %33 : vector<16x128xf32>
    %cst_19 = arith.constant dense<0.000000e+00> : vector<128xf32>
    %37 = vector.multi_reduction <add>, %36, %cst_19 [0] : vector<16x128xf32> to vector<128xf32>
    %38 = vector.shape_cast %37 : vector<128xf32> to vector<1x128xf32>
    %cst_20 = arith.constant 6.250000e-02 : f32
    %39 = vector.broadcast %cst_20 : f32 to vector<1x128xf32>
    %40 = arith.mulf %35, %39 : vector<1x128xf32>
    %cst_21 = arith.constant 6.250000e-02 : f32
    %41 = vector.broadcast %cst_21 : f32 to vector<1x128xf32>
    %42 = arith.mulf %38, %41 : vector<1x128xf32>
    %43 = arith.mulf %40, %40 : vector<1x128xf32>
    %44 = arith.subf %42, %43 : vector<1x128xf32>
    %45 = vector.broadcast %40 : vector<1x128xf32> to vector<16x128xf32>
    %46 = arith.subf %33, %45 : vector<16x128xf32>
    %cst_22 = arith.constant 9.99999974E-6 : f32
    %47 = vector.broadcast %cst_22 : f32 to vector<1x128xf32>
    %48 = arith.addf %44, %47 : vector<1x128xf32>
    %49 = math.rsqrt %48 : vector<1x128xf32>
    %50 = vector.broadcast %49 : vector<1x128xf32> to vector<16x128xf32>
    %51 = arith.mulf %46, %50 : vector<16x128xf32>
    %c0_23 = arith.constant 0 : index
    %c0_24 = arith.constant 0 : index
    %c0_25 = arith.constant 0 : index
    %52 = vector.load %arg6[%c0_23, %c0_24, %c0_25] : memref<3x1x128xf32, #tpu.memory_space<vmem>>, vector<1x1x128xf32>
    %53 = vector.shape_cast %52 : vector<1x1x128xf32> to vector<1x128xf32>
    %54 = vector.broadcast %53 : vector<1x128xf32> to vector<16x128xf32>
    %55 = arith.mulf %51, %54 : vector<16x128xf32>
    %c0_26 = arith.constant 0 : index
    %c0_27 = arith.constant 0 : index
    %c0_28 = arith.constant 0 : index
    %56 = vector.load %arg7[%c0_26, %c0_27, %c0_28] : memref<3x1x128xf32, #tpu.memory_space<vmem>>, vector<1x1x128xf32>
    %57 = vector.shape_cast %56 : vector<1x1x128xf32> to vector<1x128xf32>
    %58 = vector.broadcast %57 : vector<1x128xf32> to vector<16x128xf32>
    %59 = arith.addf %55, %58 : vector<16x128xf32>
    %cst_29 = arith.constant 0.000000e+00 : f32
    %60 = vector.broadcast %cst_29 : f32 to vector<16x128xf32>
    %61 = arith.maximumf %59, %60 : vector<16x128xf32>
    %62 = arith.truncf %61 : vector<16x128xf32> to vector<16x128xbf16>
    %c0_30 = arith.constant 0 : index
    %c0_31 = arith.constant 0 : index
    %c0_32 = arith.constant 0 : index
    %63 = vector.load %arg8[%c0_30, %c0_31, %c0_32] : memref<3x128x128xbf16, #tpu.memory_space<vmem>>, vector<1x128x128xbf16>
    %64 = vector.shape_cast %63 : vector<1x128x128xbf16> to vector<128x128xbf16>
    %cst_33 = arith.constant dense<0.000000e+00> : vector<16x128xf32>
    %65 = tpu.matmul %62, %64, %cst_33 {dimension_numbers = #tpu.dot_dimension_numbers<[1], [0], [0], [1], [0, 0, 1, 1], [], []>} : vector<16x128xbf16>, vector<128x128xbf16>, vector<16x128xf32> -> vector<16x128xf32>
    %c0_34 = arith.constant 0 : index
    %c0_35 = arith.constant 0 : index
    %c0_36 = arith.constant 0 : index
    %66 = vector.load %arg9[%c0_34, %c0_35, %c0_36] : memref<3x1x128xf32, #tpu.memory_space<vmem>>, vector<1x1x128xf32>
    %67 = vector.shape_cast %66 : vector<1x1x128xf32> to vector<1x128xf32>
    %68 = vector.broadcast %67 : vector<1x128xf32> to vector<16x128xf32>
    %69 = arith.addf %65, %68 : vector<16x128xf32>
    %cst_37 = arith.constant 0.000000e+00 : f32
    %70 = vector.broadcast %cst_37 : f32 to vector<16x128xf32>
    %71 = arith.maximumf %69, %70 : vector<16x128xf32>
    %72 = arith.truncf %71 : vector<16x128xf32> to vector<16x128xbf16>
    %cst_38 = arith.constant dense<0.000000e+00> : vector<16x128xf32>
    %73 = tpu.matmul %27, %72, %cst_38 {dimension_numbers = #tpu.dot_dimension_numbers<[1], [0], [0], [1], [0, 0, 1, 1], [], []>} : vector<16x16xbf16>, vector<16x128xbf16>, vector<16x128xf32> -> vector<16x128xf32>
    %74 = arith.truncf %73 : vector<16x128xf32> to vector<16x128xbf16>
    %c1 = arith.constant 1 : index
    %c0_39 = arith.constant 0 : index
    %c0_40 = arith.constant 0 : index
    %75 = vector.load %arg5[%c1, %c0_39, %c0_40] : memref<3x128x128xbf16, #tpu.memory_space<vmem>>, vector<1x128x128xbf16>
    %76 = vector.shape_cast %75 : vector<1x128x128xbf16> to vector<128x128xbf16>
    %cst_41 = arith.constant dense<0.000000e+00> : vector<16x128xf32>
    %77 = tpu.matmul %74, %76, %cst_41 {dimension_numbers = #tpu.dot_dimension_numbers<[1], [0], [0], [1], [0, 0, 1, 1], [], []>} : vector<16x128xbf16>, vector<128x128xbf16>, vector<16x128xf32> -> vector<16x128xf32>
    %cst_42 = arith.constant dense<0.000000e+00> : vector<128xf32>
    %78 = vector.multi_reduction <add>, %77, %cst_42 [0] : vector<16x128xf32> to vector<128xf32>
    %79 = vector.shape_cast %78 : vector<128xf32> to vector<1x128xf32>
    %80 = arith.mulf %77, %77 : vector<16x128xf32>
    %cst_43 = arith.constant dense<0.000000e+00> : vector<128xf32>
    %81 = vector.multi_reduction <add>, %80, %cst_43 [0] : vector<16x128xf32> to vector<128xf32>
    %82 = vector.shape_cast %81 : vector<128xf32> to vector<1x128xf32>
    %cst_44 = arith.constant 6.250000e-02 : f32
    %83 = vector.broadcast %cst_44 : f32 to vector<1x128xf32>
    %84 = arith.mulf %79, %83 : vector<1x128xf32>
    %cst_45 = arith.constant 6.250000e-02 : f32
    %85 = vector.broadcast %cst_45 : f32 to vector<1x128xf32>
    %86 = arith.mulf %82, %85 : vector<1x128xf32>
    %87 = arith.mulf %84, %84 : vector<1x128xf32>
    %88 = arith.subf %86, %87 : vector<1x128xf32>
    %89 = vector.broadcast %84 : vector<1x128xf32> to vector<16x128xf32>
    %90 = arith.subf %77, %89 : vector<16x128xf32>
    %cst_46 = arith.constant 9.99999974E-6 : f32
    %91 = vector.broadcast %cst_46 : f32 to vector<1x128xf32>
    %92 = arith.addf %88, %91 : vector<1x128xf32>
    %93 = math.rsqrt %92 : vector<1x128xf32>
    %94 = vector.broadcast %93 : vector<1x128xf32> to vector<16x128xf32>
    %95 = arith.mulf %90, %94 : vector<16x128xf32>
    %c1_47 = arith.constant 1 : index
    %c0_48 = arith.constant 0 : index
    %c0_49 = arith.constant 0 : index
    %96 = vector.load %arg6[%c1_47, %c0_48, %c0_49] : memref<3x1x128xf32, #tpu.memory_space<vmem>>, vector<1x1x128xf32>
    %97 = vector.shape_cast %96 : vector<1x1x128xf32> to vector<1x128xf32>
    %98 = vector.broadcast %97 : vector<1x128xf32> to vector<16x128xf32>
    %99 = arith.mulf %95, %98 : vector<16x128xf32>
    %c1_50 = arith.constant 1 : index
    %c0_51 = arith.constant 0 : index
    %c0_52 = arith.constant 0 : index
    %100 = vector.load %arg7[%c1_50, %c0_51, %c0_52] : memref<3x1x128xf32, #tpu.memory_space<vmem>>, vector<1x1x128xf32>
    %101 = vector.shape_cast %100 : vector<1x1x128xf32> to vector<1x128xf32>
    %102 = vector.broadcast %101 : vector<1x128xf32> to vector<16x128xf32>
    %103 = arith.addf %99, %102 : vector<16x128xf32>
    %cst_53 = arith.constant 0.000000e+00 : f32
    %104 = vector.broadcast %cst_53 : f32 to vector<16x128xf32>
    %105 = arith.maximumf %103, %104 : vector<16x128xf32>
    %106 = arith.truncf %105 : vector<16x128xf32> to vector<16x128xbf16>
    %c1_54 = arith.constant 1 : index
    %c0_55 = arith.constant 0 : index
    %c0_56 = arith.constant 0 : index
    %107 = vector.load %arg8[%c1_54, %c0_55, %c0_56] : memref<3x128x128xbf16, #tpu.memory_space<vmem>>, vector<1x128x128xbf16>
    %108 = vector.shape_cast %107 : vector<1x128x128xbf16> to vector<128x128xbf16>
    %cst_57 = arith.constant dense<0.000000e+00> : vector<16x128xf32>
    %109 = tpu.matmul %106, %108, %cst_57 {dimension_numbers = #tpu.dot_dimension_numbers<[1], [0], [0], [1], [0, 0, 1, 1], [], []>} : vector<16x128xbf16>, vector<128x128xbf16>, vector<16x128xf32> -> vector<16x128xf32>
    %c1_58 = arith.constant 1 : index
    %c0_59 = arith.constant 0 : index
    %c0_60 = arith.constant 0 : index
    %110 = vector.load %arg9[%c1_58, %c0_59, %c0_60] : memref<3x1x128xf32, #tpu.memory_space<vmem>>, vector<1x1x128xf32>
    %111 = vector.shape_cast %110 : vector<1x1x128xf32> to vector<1x128xf32>
    %112 = vector.broadcast %111 : vector<1x128xf32> to vector<16x128xf32>
    %113 = arith.addf %109, %112 : vector<16x128xf32>
    %cst_61 = arith.constant 0.000000e+00 : f32
    %114 = vector.broadcast %cst_61 : f32 to vector<16x128xf32>
    %115 = arith.maximumf %113, %114 : vector<16x128xf32>
    %116 = arith.truncf %115 : vector<16x128xf32> to vector<16x128xbf16>
    %cst_62 = arith.constant dense<0.000000e+00> : vector<16x128xf32>
    %117 = tpu.matmul %27, %116, %cst_62 {dimension_numbers = #tpu.dot_dimension_numbers<[1], [0], [0], [1], [0, 0, 1, 1], [], []>} : vector<16x16xbf16>, vector<16x128xbf16>, vector<16x128xf32> -> vector<16x128xf32>
    %118 = arith.truncf %117 : vector<16x128xf32> to vector<16x128xbf16>
    %c2 = arith.constant 2 : index
    %c0_63 = arith.constant 0 : index
    %c0_64 = arith.constant 0 : index
    %119 = vector.load %arg5[%c2, %c0_63, %c0_64] : memref<3x128x128xbf16, #tpu.memory_space<vmem>>, vector<1x128x128xbf16>
    %120 = vector.shape_cast %119 : vector<1x128x128xbf16> to vector<128x128xbf16>
    %cst_65 = arith.constant dense<0.000000e+00> : vector<16x128xf32>
    %121 = tpu.matmul %118, %120, %cst_65 {dimension_numbers = #tpu.dot_dimension_numbers<[1], [0], [0], [1], [0, 0, 1, 1], [], []>} : vector<16x128xbf16>, vector<128x128xbf16>, vector<16x128xf32> -> vector<16x128xf32>
    %cst_66 = arith.constant dense<0.000000e+00> : vector<128xf32>
    %122 = vector.multi_reduction <add>, %121, %cst_66 [0] : vector<16x128xf32> to vector<128xf32>
    %123 = vector.shape_cast %122 : vector<128xf32> to vector<1x128xf32>
    %124 = arith.mulf %121, %121 : vector<16x128xf32>
    %cst_67 = arith.constant dense<0.000000e+00> : vector<128xf32>
    %125 = vector.multi_reduction <add>, %124, %cst_67 [0] : vector<16x128xf32> to vector<128xf32>
    %126 = vector.shape_cast %125 : vector<128xf32> to vector<1x128xf32>
    %cst_68 = arith.constant 6.250000e-02 : f32
    %127 = vector.broadcast %cst_68 : f32 to vector<1x128xf32>
    %128 = arith.mulf %123, %127 : vector<1x128xf32>
    %cst_69 = arith.constant 6.250000e-02 : f32
    %129 = vector.broadcast %cst_69 : f32 to vector<1x128xf32>
    %130 = arith.mulf %126, %129 : vector<1x128xf32>
    %131 = arith.mulf %128, %128 : vector<1x128xf32>
    %132 = arith.subf %130, %131 : vector<1x128xf32>
    %133 = vector.broadcast %128 : vector<1x128xf32> to vector<16x128xf32>
    %134 = arith.subf %121, %133 : vector<16x128xf32>
    %cst_70 = arith.constant 9.99999974E-6 : f32
    %135 = vector.broadcast %cst_70 : f32 to vector<1x128xf32>
    %136 = arith.addf %132, %135 : vector<1x128xf32>
    %137 = math.rsqrt %136 : vector<1x128xf32>
    %138 = vector.broadcast %137 : vector<1x128xf32> to vector<16x128xf32>
    %139 = arith.mulf %134, %138 : vector<16x128xf32>
    %c2_71 = arith.constant 2 : index
    %c0_72 = arith.constant 0 : index
    %c0_73 = arith.constant 0 : index
    %140 = vector.load %arg6[%c2_71, %c0_72, %c0_73] : memref<3x1x128xf32, #tpu.memory_space<vmem>>, vector<1x1x128xf32>
    %141 = vector.shape_cast %140 : vector<1x1x128xf32> to vector<1x128xf32>
    %142 = vector.broadcast %141 : vector<1x128xf32> to vector<16x128xf32>
    %143 = arith.mulf %139, %142 : vector<16x128xf32>
    %c2_74 = arith.constant 2 : index
    %c0_75 = arith.constant 0 : index
    %c0_76 = arith.constant 0 : index
    %144 = vector.load %arg7[%c2_74, %c0_75, %c0_76] : memref<3x1x128xf32, #tpu.memory_space<vmem>>, vector<1x1x128xf32>
    %145 = vector.shape_cast %144 : vector<1x1x128xf32> to vector<1x128xf32>
    %146 = vector.broadcast %145 : vector<1x128xf32> to vector<16x128xf32>
    %147 = arith.addf %143, %146 : vector<16x128xf32>
    %cst_77 = arith.constant 0.000000e+00 : f32
    %148 = vector.broadcast %cst_77 : f32 to vector<16x128xf32>
    %149 = arith.maximumf %147, %148 : vector<16x128xf32>
    %150 = arith.truncf %149 : vector<16x128xf32> to vector<16x128xbf16>
    %c2_78 = arith.constant 2 : index
    %c0_79 = arith.constant 0 : index
    %c0_80 = arith.constant 0 : index
    %151 = vector.load %arg8[%c2_78, %c0_79, %c0_80] : memref<3x128x128xbf16, #tpu.memory_space<vmem>>, vector<1x128x128xbf16>
    %152 = vector.shape_cast %151 : vector<1x128x128xbf16> to vector<128x128xbf16>
    %cst_81 = arith.constant dense<0.000000e+00> : vector<16x128xf32>
    %153 = tpu.matmul %150, %152, %cst_81 {dimension_numbers = #tpu.dot_dimension_numbers<[1], [0], [0], [1], [0, 0, 1, 1], [], []>} : vector<16x128xbf16>, vector<128x128xbf16>, vector<16x128xf32> -> vector<16x128xf32>
    %c2_82 = arith.constant 2 : index
    %c0_83 = arith.constant 0 : index
    %c0_84 = arith.constant 0 : index
    %154 = vector.load %arg9[%c2_82, %c0_83, %c0_84] : memref<3x1x128xf32, #tpu.memory_space<vmem>>, vector<1x1x128xf32>
    %155 = vector.shape_cast %154 : vector<1x1x128xf32> to vector<1x128xf32>
    %156 = vector.broadcast %155 : vector<1x128xf32> to vector<16x128xf32>
    %157 = arith.addf %153, %156 : vector<16x128xf32>
    %cst_85 = arith.constant 0.000000e+00 : f32
    %158 = vector.broadcast %cst_85 : f32 to vector<16x128xf32>
    %159 = arith.maximumf %157, %158 : vector<16x128xf32>
    %c0_86 = arith.constant 0 : index
    %c0_87 = arith.constant 0 : index
    %160 = vector.load %arg2[%c0_86, %c0_87] : memref<2x16xbf16, #tpu.memory_space<vmem>>, vector<2x16xbf16>
    %161 = arith.truncf %159 : vector<16x128xf32> to vector<16x128xbf16>
    %cst_88 = arith.constant dense<0.000000e+00> : vector<2x128xf32>
    %162 = tpu.matmul %160, %161, %cst_88 {dimension_numbers = #tpu.dot_dimension_numbers<[1], [0], [0], [1], [0, 0, 1, 1], [], []>} : vector<2x16xbf16>, vector<16x128xbf16>, vector<2x128xf32> -> vector<2x128xf32>
    %cst_89 = arith.constant dense<0.000000e+00> : vector<128xf32>
    %163 = vector.multi_reduction <add>, %162, %cst_89 [0] : vector<2x128xf32> to vector<128xf32>
    %164 = vector.shape_cast %163 : vector<128xf32> to vector<1x128xf32>
    %165 = arith.mulf %162, %162 : vector<2x128xf32>
    %cst_90 = arith.constant dense<0.000000e+00> : vector<128xf32>
    %166 = vector.multi_reduction <add>, %165, %cst_90 [0] : vector<2x128xf32> to vector<128xf32>
    %167 = vector.shape_cast %166 : vector<128xf32> to vector<1x128xf32>
    %cst_91 = arith.constant 5.000000e-01 : f32
    %168 = vector.broadcast %cst_91 : f32 to vector<1x128xf32>
    %169 = arith.mulf %164, %168 : vector<1x128xf32>
    %cst_92 = arith.constant 5.000000e-01 : f32
    %170 = vector.broadcast %cst_92 : f32 to vector<1x128xf32>
    %171 = arith.mulf %167, %170 : vector<1x128xf32>
    %172 = arith.mulf %169, %169 : vector<1x128xf32>
    %173 = arith.subf %171, %172 : vector<1x128xf32>
    %174 = vector.broadcast %169 : vector<1x128xf32> to vector<2x128xf32>
    %175 = arith.subf %162, %174 : vector<2x128xf32>
    %cst_93 = arith.constant 9.99999974E-6 : f32
    %176 = vector.broadcast %cst_93 : f32 to vector<1x128xf32>
    %177 = arith.addf %173, %176 : vector<1x128xf32>
    %178 = math.rsqrt %177 : vector<1x128xf32>
    %179 = vector.broadcast %178 : vector<1x128xf32> to vector<2x128xf32>
    %180 = arith.mulf %175, %179 : vector<2x128xf32>
    %181 = arith.truncf %180 : vector<2x128xf32> to vector<2x128xbf16>
    %c0_94 = arith.constant 0 : index
    %c0_95 = arith.constant 0 : index
    %c0_96 = arith.constant 0 : index
    %182 = vector.load %arg10[%c0_94, %c0_95, %c0_96] : memref<1x128x128xbf16, #tpu.memory_space<vmem>>, vector<1x128x128xbf16>
    %183 = vector.shape_cast %182 : vector<1x128x128xbf16> to vector<128x128xbf16>
    %cst_97 = arith.constant dense<0.000000e+00> : vector<2x128xf32>
    %184 = tpu.matmul %181, %183, %cst_97 {dimension_numbers = #tpu.dot_dimension_numbers<[1], [0], [0], [1], [0, 0, 1, 1], [], []>} : vector<2x128xbf16>, vector<128x128xbf16>, vector<2x128xf32> -> vector<2x128xf32>
    %c0_98 = arith.constant 0 : index
    %c0_99 = arith.constant 0 : index
    %c0_100 = arith.constant 0 : index
    %185 = vector.load %arg11[%c0_98, %c0_99, %c0_100] : memref<1x1x128xf32, #tpu.memory_space<vmem>>, vector<1x1x128xf32>
    %186 = vector.shape_cast %185 : vector<1x1x128xf32> to vector<1x128xf32>
    %187 = vector.broadcast %186 : vector<1x128xf32> to vector<2x128xf32>
    %188 = arith.addf %184, %187 : vector<2x128xf32>
    %cst_101 = arith.constant 0.000000e+00 : f32
    %189 = vector.broadcast %cst_101 : f32 to vector<2x128xf32>
    %190 = arith.maximumf %188, %189 : vector<2x128xf32>
    %cst_102 = arith.constant dense<0.000000e+00> : vector<128xf32>
    %191 = vector.multi_reduction <add>, %190, %cst_102 [0] : vector<2x128xf32> to vector<128xf32>
    %192 = vector.shape_cast %191 : vector<128xf32> to vector<1x128xf32>
    %193 = arith.mulf %190, %190 : vector<2x128xf32>
    %cst_103 = arith.constant dense<0.000000e+00> : vector<128xf32>
    %194 = vector.multi_reduction <add>, %193, %cst_103 [0] : vector<2x128xf32> to vector<128xf32>
    %195 = vector.shape_cast %194 : vector<128xf32> to vector<1x128xf32>
    %cst_104 = arith.constant 5.000000e-01 : f32
    %196 = vector.broadcast %cst_104 : f32 to vector<1x128xf32>
    %197 = arith.mulf %192, %196 : vector<1x128xf32>
    %cst_105 = arith.constant 5.000000e-01 : f32
    %198 = vector.broadcast %cst_105 : f32 to vector<1x128xf32>
    %199 = arith.mulf %195, %198 : vector<1x128xf32>
    %200 = arith.mulf %197, %197 : vector<1x128xf32>
    %201 = arith.subf %199, %200 : vector<1x128xf32>
    %202 = vector.broadcast %197 : vector<1x128xf32> to vector<2x128xf32>
    %203 = arith.subf %190, %202 : vector<2x128xf32>
    %cst_106 = arith.constant 9.99999974E-6 : f32
    %204 = vector.broadcast %cst_106 : f32 to vector<1x128xf32>
    %205 = arith.addf %201, %204 : vector<1x128xf32>
    %206 = math.rsqrt %205 : vector<1x128xf32>
    %207 = vector.broadcast %206 : vector<1x128xf32> to vector<2x128xf32>
    %208 = arith.mulf %203, %207 : vector<2x128xf32>
    %209 = arith.truncf %208 : vector<2x128xf32> to vector<2x128xbf16>
    %c0_107 = arith.constant 0 : index
    %c0_108 = arith.constant 0 : index
    %210 = vector.load %arg12[%c0_107, %c0_108] : memref<128x128xbf16, #tpu.memory_space<vmem>>, vector<128x128xbf16>
    %cst_109 = arith.constant dense<0.000000e+00> : vector<2x128xf32>
    %211 = tpu.matmul %209, %210, %cst_109 {dimension_numbers = #tpu.dot_dimension_numbers<[1], [0], [0], [1], [0, 0, 1, 1], [], []>} : vector<2x128xbf16>, vector<128x128xbf16>, vector<2x128xf32> -> vector<2x128xf32>
    %c0_110 = arith.constant 0 : index
    %c0_111 = arith.constant 0 : index
    %212 = vector.load %arg13[%c0_110, %c0_111] : memref<1x128xf32, #tpu.memory_space<vmem>>, vector<1x128xf32>
    %213 = vector.broadcast %212 : vector<1x128xf32> to vector<2x128xf32>
    %214 = arith.addf %211, %213 : vector<2x128xf32>
    %215 = tpu.iota {dimensions = array<i32: 1>} : vector<2x128xi32>
    %c4_i32 = arith.constant 4 : i32
    %216 = vector.broadcast %c4_i32 : i32 to vector<2x128xi32>
    %217 = arith.cmpi slt, %215, %216 : vector<2x128xi32>
    %cst_112 = arith.constant -1.000000e+30 : f32
    %218 = vector.broadcast %cst_112 : f32 to vector<2x128xf32>
    %219 = arith.select %217, %214, %218 : vector<2x128xi1>, vector<2x128xf32>
    %cst_113 = arith.constant dense<0xFF800000> : vector<2xf32>
    %220 = vector.multi_reduction <maximumf>, %219, %cst_113 [1] : vector<2x128xf32> to vector<2xf32>
    %221 = vector.shape_cast %220 : vector<2xf32> to vector<2x1xf32>
    %222 = vector.broadcast %221 : vector<2x1xf32> to vector<2x128xf32>
    %223 = arith.subf %219, %222 : vector<2x128xf32>
    %224 = math.exp %223 : vector<2x128xf32>
    %cst_114 = arith.constant 0.000000e+00 : f32
    %225 = vector.broadcast %cst_114 : f32 to vector<2x128xf32>
    %226 = arith.select %217, %224, %225 : vector<2x128xi1>, vector<2x128xf32>
    %cst_115 = arith.constant dense<0.000000e+00> : vector<2xf32>
    %227 = vector.multi_reduction <add>, %226, %cst_115 [1] : vector<2x128xf32> to vector<2xf32>
    %228 = vector.shape_cast %227 : vector<2xf32> to vector<2x1xf32>
    %229 = math.log %228 : vector<2x1xf32>
    %230 = vector.broadcast %229 : vector<2x1xf32> to vector<2x128xf32>
    %231 = arith.subf %223, %230 : vector<2x128xf32>
    %cst_116 = arith.constant 0.000000e+00 : f32
    %232 = vector.broadcast %cst_116 : f32 to vector<2x128xf32>
    %233 = arith.select %217, %231, %232 : vector<2x128xi1>, vector<2x128xf32>
    %c0_117 = arith.constant 0 : index
    %c0_118 = arith.constant 0 : index
    %234 = vector.load %arg14[%c0_117, %c0_118] : memref<2x128xf32, #tpu.memory_space<vmem>>, vector<2x128xf32>
    tpu.vector_store %arg14[%c0_117, %c0_118], %233 {strides = array<i32>} : memref<2x128xf32, #tpu.memory_space<vmem>>, vector<2x128xf32>,
    return
  }
}

</mosaic_0001>

<llo_original>
// kernel: tpu_custom_call.1
$region0: #{tpu_custom_call.1}
  #allocation0 [shape = 'u32[]', space=smem, size = 0x4, offset = 0x4, fixed_abs, tag = 'smem constant byte address 0x4 - core index']
  #allocation1 [shape = 'u32[144,128]{1,0:T(1,128)}', space=vmem, size = 0x12000, scoped, tag = 'internal scratch']
  %s0 = inlined_call_operand.hbm [shape: f32[16,128], index: 0, kind: input, shape index: {}]
  %s1 = inlined_call_operand.hbm [shape: bf16[16,16], index: 1, kind: input, shape index: {}]
  %s2 = inlined_call_operand.vmem [shape: bf16[2,16], index: 2, kind: input, shape index: {}]
  %s3 = inlined_call_operand.hbm [shape: bf16[128,128], index: 3, kind: input, shape index: {}]
  %s4 = inlined_call_operand.vmem [shape: f32[1,128], index: 4, kind: input, shape index: {}]
  %s5 = inlined_call_operand.hbm [shape: bf16[3,128,128], index: 5, kind: input, shape index: {}]
  %s6 = inlined_call_operand.vmem [shape: f32[3,1,128], index: 6, kind: input, shape index: {}]
  %s7 = inlined_call_operand.vmem [shape: f32[3,1,128], index: 7, kind: input, shape index: {}]
  %s8 = inlined_call_operand.hbm [shape: bf16[3,128,128], index: 8, kind: input, shape index: {}]
  %s9 = inlined_call_operand.vmem [shape: f32[3,1,128], index: 9, kind: input, shape index: {}]
  %s10 = inlined_call_operand.hbm [shape: bf16[1,128,128], index: 10, kind: input, shape index: {}]
  %s11 = inlined_call_operand.vmem [shape: f32[1,1,128], index: 11, kind: input, shape index: {}]
  %s12 = inlined_call_operand.hbm [shape: bf16[128,128], index: 12, kind: input, shape index: {}]
  %s13 = inlined_call_operand.vmem [shape: f32[1,128], index: 13, kind: input, shape index: {}]
  %s14 = inlined_call_operand.hbm [shape: f32[2,128], index: 14, kind: output, shape index: {}]
  %s15 = sld [smem:[#allocation0]]
  $region94: #{tpu_custom_call.1} parent=0
    _
  %s17 = ssub.s32 1, %s15
  %s18 = scalar_select 0, %s17, %s15
  $region1: #{tpu_custom_call.1} parent=0
    #allocation2 [shape = 'u8[8192]{0}', space=vmem, size = 0x2000, scoped, tag = 'input window, operand 0, single buffered']
    #allocation3 [shape = 's32[1]{0}', space=sflag, size = 0x4, scoped, tag = 'scoped memory for tpu_custom_call.1']
    #allocation4 [shape = 's32[1]{0}', space=sflag, size = 0x4, scoped, tag = 'scoped memory for tpu_custom_call.1']
    #allocation5 [shape = 'u8[4096]{0}', space=vmem, size = 0x1000, scoped, tag = 'input window, operand 1, single buffered']
    #allocation6 [shape = 's32[1]{0}', space=sflag, size = 0x4, scoped, tag = 'scoped memory for tpu_custom_call.1']
    #allocation7 [shape = 'u8[32768]{0}', space=vmem, size = 0x8000, scoped, tag = 'input window, operand 3, single buffered']
    #allocation8 [shape = 'u8[98304]{0}', space=vmem, size = 0x18000, scoped, tag = 'input window, operand 5, single buffered']
    #allocation9 [shape = 's32[1]{0}', space=sflag, size = 0x4, scoped, tag = 'scoped memory for tpu_custom_call.1']
    #allocation10 [shape = 'u8[98304]{0}', space=vmem, size = 0x18000, scoped, tag = 'input window, operand 8, single buffered']
    #allocation11 [shape = 'u8[32768]{0}', space=vmem, size = 0x8000, scoped, tag = 'input window, operand 10, single buffered']
    #allocation12 [shape = 's32[1]{0}', space=sflag, size = 0x4, scoped, tag = 'scoped memory for tpu_custom_call.1']
    #allocation13 [shape = 'u8[32768]{0}', space=vmem, size = 0x8000, scoped, tag = 'input window, operand 12, single buffered']
    #allocation14 [shape = 'u8[1024]{0}', space=vmem, size = 0x400, scoped, tag = 'output window, operand 0, single buffered']
    %19 = vsyncpa [#allocation3], 0
    %20 = vsyncpa [#allocation6], 0
    %21 = vsyncpa [#allocation9], 0
    %22 = vsyncpa [#allocation12], 0
    %23 = vsyncpa [#allocation4], 0
    // Predicated region
    $region2: #{tpu_custom_call.1} parent=1 // pred_check
      _
    $region3: #{tpu_custom_call.1} parent=1 // pred_check_branch
      %25 = sbr.rel (0) target = $region5
    $region4: #{tpu_custom_call.1} parent=1 // pred_region
      %s27 = ssub.s32 256, 256
      %28 = vsyncadd [#allocation3], %s27
      %s29 = sshll.u32 [#allocation2], 4
      %s30 = int_to_ptr.vmem [resolvable:$true] %s29
      %35 = dma.hbm_to_vmem [thread:$0]  %s0, 256, %s30, [#allocation3], 128, 128, 8
    $region5: #{tpu_custom_call.1} parent=1 // pred_fallthru
      _
    // Predicated region
    $region6: #{tpu_custom_call.1} parent=1 // pred_check
      _
    $region7: #{tpu_custom_call.1} parent=1 // pred_check_branch
      %37 = sbr.rel (0) target = $region9
    $region8: #{tpu_custom_call.1} parent=1 // pred_region
      %s39 = ssub.s32 128, 128
      %40 = vsyncadd [#allocation6], %s39
      %s41 = sshll.u32 [#allocation5], 4
      %s42 = int_to_ptr.vmem [resolvable:$true] %s41
      %47 = dma.hbm_to_vmem [thread:$0]  %s1, 128, %s42, [#allocation6], 64, 64, 4
    $region9: #{tpu_custom_call.1} parent=1 // pred_fallthru
      _
    // Predicated region
    $region10: #{tpu_custom_call.1} parent=1 // pred_check
      _
    $region11: #{tpu_custom_call.1} parent=1 // pred_check_branch
      %49 = sbr.rel (0) target = $region13
    $region12: #{tpu_custom_call.1} parent=1 // pred_region
      _
    $region13: #{tpu_custom_call.1} parent=1 // pred_fallthru
      _
    // Predicated region
    $region14: #{tpu_custom_call.1} parent=1 // pred_check
      _
    $region15: #{tpu_custom_call.1} parent=1 // pred_check_branch
      %51 = sbr.rel (0) target = $region17
    $region16: #{tpu_custom_call.1} parent=1 // pred_region
      %s53 = ssub.s32 1024, 1024
      %54 = vsyncadd [#allocation6], %s53
      %s55 = sshll.u32 [#allocation7], 4
      %s56 = int_to_ptr.vmem [resolvable:$true] %s55
      %61 = dma.hbm_to_vmem [thread:$0]  %s3, 1024, %s56, [#allocation6], 64, 64, 4
    $region17: #{tpu_custom_call.1} parent=1 // pred_fallthru
      _
    // Predicated region
    $region18: #{tpu_custom_call.1} parent=1 // pred_check
      _
    $region19: #{tpu_custom_call.1} parent=1 // pred_check_branch
      %63 = sbr.rel (0) target = $region21
    $region20: #{tpu_custom_call.1} parent=1 // pred_region
      _
    $region21: #{tpu_custom_call.1} parent=1 // pred_fallthru
      _
    // Predicated region
    $region22: #{tpu_custom_call.1} parent=1 // pred_check
      _
    $region23: #{tpu_custom_call.1} parent=1 // pred_check_branch
      %65 = sbr.rel (0) target = $region25
    $region24: #{tpu_custom_call.1} parent=1 // pred_region
      %s67 = ssub.s32 3072, 3072
      %68 = vsyncadd [#allocation9], %s67
      %s69 = sshll.u32 [#allocation8], 4
      %s70 = int_to_ptr.vmem [resolvable:$true] %s69
      %75 = dma.hbm_to_vmem [thread:$0]  %s5, 3072, %s70, [#allocation9], 64, 64, 4
    $region25: #{tpu_custom_call.1} parent=1 // pred_fallthru
      _
    // Predicated region
    $region26: #{tpu_custom_call.1} parent=1 // pred_check
      _
    $region27: #{tpu_custom_call.1} parent=1 // pred_check_branch
      %77 = sbr.rel (0) target = $region29
    $region28: #{tpu_custom_call.1} parent=1 // pred_region
      _
    $region29: #{tpu_custom_call.1} parent=1 // pred_fallthru
      _
    // Predicated region
    $region30: #{tpu_custom_call.1} parent=1 // pred_check
      _
    $region31: #{tpu_custom_call.1} parent=1 // pred_check_branch
      %79 = sbr.rel (0) target = $region33
    $region32: #{tpu_custom_call.1} parent=1 // pred_region
      _
    $region33: #{tpu_custom_call.1} parent=1 // pred_fallthru
      _
    // Predicated region
    $region34: #{tpu_custom_call.1} parent=1 // pred_check
      _
    $region35: #{tpu_custom_call.1} parent=1 // pred_check_branch
      %81 = sbr.rel (0) target = $region37
    $region36: #{tpu_custom_call.1} parent=1 // pred_region
      %s83 = ssub.s32 3072, 3072
      %84 = vsyncadd [#allocation9], %s83
      %s85 = sshll.u32 [#allocation10], 4
      %s86 = int_to_ptr.vmem [resolvable:$true] %s85
      %91 = dma.hbm_to_vmem [thread:$0]  %s8, 3072, %s86, [#allocation9], 64, 64, 4
    $region37: #{tpu_custom_call.1} parent=1 // pred_fallthru
      _
    // Predicated region
    $region38: #{tpu_custom_call.1} parent=1 // pred_check
      _
    $region39: #{tpu_custom_call.1} parent=1 // pred_check_branch
      %93 = sbr.rel (0) target = $region41
    $region40: #{tpu_custom_call.1} parent=1 // pred_region
      _
    $region41: #{tpu_custom_call.1} parent=1 // pred_fallthru
      _
    // Predicated region
    $region42: #{tpu_custom_call.1} parent=1 // pred_check
      _
    $region43: #{tpu_custom_call.1} parent=1 // pred_check_branch
      %95 = sbr.rel (0) target = $region45
    $region44: #{tpu_custom_call.1} parent=1 // pred_region
      %s97 = ssub.s32 1024, 1024
      %98 = vsyncadd [#allocation12], %s97
      %s99 = sshll.u32 [#allocation11], 4
      %s100 = int_to_ptr.vmem [resolvable:$true] %s99
      %105 = dma.hbm_to_vmem [thread:$0]  %s10, 1024, %s100, [#allocation12], 64, 64, 4
    $region45: #{tpu_custom_call.1} parent=1 // pred_fallthru
      _
    // Predicated region
    $region46: #{tpu_custom_call.1} parent=1 // pred_check
      _
    $region47: #{tpu_custom_call.1} parent=1 // pred_check_branch
      %107 = sbr.rel (0) target = $region49
    $region48: #{tpu_custom_call.1} parent=1 // pred_region
      _
    $region49: #{tpu_custom_call.1} parent=1 // pred_fallthru
      _
    // Predicated region
    $region50: #{tpu_custom_call.1} parent=1 // pred_check
      _
    $region51: #{tpu_custom_call.1} parent=1 // pred_check_branch
      %109 = sbr.rel (0) target = $region53
    $region52: #{tpu_custom_call.1} parent=1 // pred_region
      %s111 = ssub.s32 1024, 1024
      %112 = vsyncadd [#allocation12], %s111
      %s113 = sshll.u32 [#allocation13], 4
      %s114 = int_to_ptr.vmem [resolvable:$true] %s113
      %119 = dma.hbm_to_vmem [thread:$0]  %s12, 1024, %s114, [#allocation12], 64, 64, 4
    $region53: #{tpu_custom_call.1} parent=1 // pred_fallthru
      _
    // Predicated region
    $region54: #{tpu_custom_call.1} parent=1 // pred_check
      _
    $region55: #{tpu_custom_call.1} parent=1 // pred_check_branch
      %121 = sbr.rel (0) target = $region57
    $region56: #{tpu_custom_call.1} parent=1 // pred_region
      _
    $region57: #{tpu_custom_call.1} parent=1 // pred_fallthru
      _
    // Predicated region
    $region58: #{tpu_custom_call.1} parent=1 // pred_check
      _
    $region59: #{tpu_custom_call.1} parent=1 // pred_check_branch
      %123 = sbr.rel (0) target = $region61
    $region60: #{tpu_custom_call.1} parent=1 // pred_region
      %124 = dma.done [#allocation3], 256
    $region61: #{tpu_custom_call.1} parent=1 // pred_fallthru
      _
    // Predicated region
    $region62: #{tpu_custom_call.1} parent=1 // pred_check
      _
    $region63: #{tpu_custom_call.1} parent=1 // pred_check_branch
      %126 = sbr.rel (0) target = $region65
    $region64: #{tpu_custom_call.1} parent=1 // pred_region
      %127 = dma.done [#allocation6], 128
    $region65: #{tpu_custom_call.1} parent=1 // pred_fallthru
      _
    // Predicated region
    $region66: #{tpu_custom_call.1} parent=1 // pred_check
      _
    $region67: #{tpu_custom_call.1} parent=1 // pred_check_branch
      %129 = sbr.rel (0) target = $region69
    $region68: #{tpu_custom_call.1} parent=1 // pred_region
      %130 = dma.done [#allocation6], 1024
    $region69: #{tpu_custom_call.1} parent=1 // pred_fallthru
      _
    // Predicated region
    $region70: #{tpu_custom_call.1} parent=1 // pred_check
      _
    $region71: #{tpu_custom_call.1} parent=1 // pred_check_branch
      %132 = sbr.rel (0) target = $region73
    $region72: #{tpu_custom_call.1} parent=1 // pred_region
      %133 = dma.done [#allocation9], 3072
    $region73: #{tpu_custom_call.1} parent=1 // pred_fallthru
      _
    // Predicated region
    $region74: #{tpu_custom_call.1} parent=1 // pred_check
      _
    $region75: #{tpu_custom_call.1} parent=1 // pred_check_branch
      %135 = sbr.rel (0) target = $region77
    $region76: #{tpu_custom_call.1} parent=1 // pred_region
      %136 = dma.done [#allocation9], 3072
    $region77: #{tpu_custom_call.1} parent=1 // pred_fallthru
      _
    // Predicated region
    $region78: #{tpu_custom_call.1} parent=1 // pred_check
      _
    $region79: #{tpu_custom_call.1} parent=1 // pred_check_branch
      %138 = sbr.rel (0) target = $region81
    $region80: #{tpu_custom_call.1} parent=1 // pred_region
      %139 = dma.done [#allocation12], 1024
    $region81: #{tpu_custom_call.1} parent=1 // pred_fallthru
      _
    // Predicated region
    $region82: #{tpu_custom_call.1} parent=1 // pred_check
      _
    $region83: #{tpu_custom_call.1} parent=1 // pred_check_branch
      %141 = sbr.rel (0) target = $region85
    $region84: #{tpu_custom_call.1} parent=1 // pred_region
      %142 = dma.done [#allocation12], 1024
    $region85: #{tpu_custom_call.1} parent=1 // pred_fallthru
      _
    %v144 = vld [vmem:[#allocation2] sm:$0xff]
    %v145 = vld [vmem:[#allocation2 + $0x8] sm:$0xff]
    %v146 = vadd.f32 %v144, %v145
    %v147 = vrot.slane %v146, 4
    %v148 = vadd.f32 %v146, %v147
    %v149 = vrot.slane %v148, 2
    %v150 = vadd.f32 %v148, %v149
    %v151 = vrot.slane %v150, 1
    %v152 = vadd.f32 %v150, %v151
    %v153 = vmul.f32 %v144, %v144
    %v154 = vmul.f32 %v145, %v145
    %v155 = vadd.f32 %v153, %v154
    %v156 = vrot.slane %v155, 4
    %v157 = vadd.f32 %v155, %v156
    %v158 = vrot.slane %v157, 2
    %v159 = vadd.f32 %v157, %v158
    %v160 = vrot.slane %v159, 1
    %v161 = vadd.f32 %v159, %v160
    %v162 = vmul.f32 %v152, 0.0625
    %v163 = vmul.f32 %v161, 0.0625
    %v164 = vmul.f32 %v162, %v162
    %v165 = vsub.f32 %v163, %v164
    %v166 = vsub.f32 %v144, %v162
    %v167 = vsub.f32 %v145, %v162
    %v168 = vadd.f32 %v165, 1e-05
    %v169 = vrsqrt.pop %v168
    %v170 = vmul.f32 %v166, %v169
    %v171 = vmul.f32 %v167, %v169
    %v172 = vpack.c.bf16 %v171, %v170
    %v173 = vld [vmem:[#allocation7] sm:$0xf]
    %v174 = vld [vmem:[#allocation7 + $0x4] sm:$0xf]
    %v175 = vld [vmem:[#allocation7 + $0x8] sm:$0xf]
    %v176 = vld [vmem:[#allocation7 + $0xc] sm:$0xf]
    %v177 = vld [vmem:[#allocation7 + $0x10] sm:$0xf]
    %v178 = vld [vmem:[#allocation7 + $0x14] sm:$0xf]
    %v179 = vld [vmem:[#allocation7 + $0x18] sm:$0xf]
    %v180 = vld [vmem:[#allocation7 + $0x1c] sm:$0xf]
    %v181 = vld [vmem:[#allocation7 + $0x20] sm:$0xf]
    %v182 = vld [vmem:[#allocation7 + $0x24] sm:$0xf]
    %v183 = vld [vmem:[#allocation7 + $0x28] sm:$0xf]
    %v184 = vld [vmem:[#allocation7 + $0x2c] sm:$0xf]
    %v185 = vld [vmem:[#allocation7 + $0x30] sm:$0xf]
    %v186 = vld [vmem:[#allocation7 + $0x34] sm:$0xf]
    %v187 = vld [vmem:[#allocation7 + $0x38] sm:$0xf]
    %v188 = vld [vmem:[#allocation7 + $0x3c] sm:$0xf]
    %v189 = vld [vmem:[%s4] sm:$0x1]
    %v191 = vlaneseq
    %v192 = vshrl.u32 %v191, 7
    %v193 = vsub.s32 0, %v192
    %v194 = vrot.slane %v189, %v193
    %v212 = vunpack.c.l.b16 %v173
    %v213 = vunpack.c.l.b16 %v174
    %v214 = vunpack.c.l.b16 %v175
    %v215 = vunpack.c.l.b16 %v176
    %v216 = vunpack.c.l.b16 %v177
    %v217 = vunpack.c.l.b16 %v178
    %v218 = vunpack.c.l.b16 %v179
    %v219 = vunpack.c.l.b16 %v180
    %v220 = vunpack.c.l.b16 %v181
    %v221 = vunpack.c.l.b16 %v182
    %v222 = vunpack.c.l.b16 %v183
    %v223 = vunpack.c.l.b16 %v184
    %v224 = vunpack.c.l.b16 %v185
    %v225 = vunpack.c.l.b16 %v186
    %v226 = vunpack.c.l.b16 %v187
    %v227 = vunpack.c.l.b16 %v188
    %v228 = vpack.c.b16 %v213, %v212
    %v229 = vpack.c.b16 %v215, %v214
    %v230 = vpack.c.b16 %v217, %v216
    %v231 = vpack.c.b16 %v219, %v218
    %v232 = vpack.c.b16 %v221, %v220
    %v233 = vpack.c.b16 %v223, %v222
    %v234 = vpack.c.b16 %v225, %v224
    %v235 = vpack.c.b16 %v227, %v226
    %244 = vmatprep.subr.bf16.mxu0 0
    %245 = vmatpush1.bf16.msra.mxu0 %v228
    %246 = vmatprep.subr.bf16.mxu0 0
    %247 = vmatpush1.bf16.msra.mxu0 %v229
    %248 = vmatprep.subr.bf16.mxu0 0
    %249 = vmatpush1.bf16.msra.mxu0 %v230
    %250 = vmatprep.subr.bf16.mxu0 0
    %251 = vmatpush1.bf16.msra.mxu0 %v231
    %252 = vmatprep.subr.bf16.mxu0 0
    %253 = vmatpush1.bf16.msra.mxu0 %v232
    %254 = vmatprep.subr.bf16.mxu0 0
    %255 = vmatpush1.bf16.msra.mxu0 %v233
    %256 = vmatprep.subr.bf16.mxu0 0
    %257 = vmatpush1.bf16.msra.mxu0 %v234
    %258 = vmatprep.subr.bf16.mxu0 0
    %259 = vmatpush1.bf16.msra.mxu0 %v235
    %260 = vmatprep.subr.bf16.mxu0 0
    %261 = vmatpush1.bf16.msra.mxu0 0
    %262 = vmatprep.subr.bf16.mxu0 0
    %263 = vmatpush1.bf16.msra.mxu0 0
    %264 = vmatprep.subr.bf16.mxu0 0
    %265 = vmatpush1.bf16.msra.mxu0 0
    %266 = vmatprep.subr.bf16.mxu0 0
    %267 = vmatpush1.bf16.msra.mxu0 0
    %268 = vmatprep.subr.bf16.mxu0 0
    %269 = vmatpush1.bf16.msra.mxu0 0
    %270 = vmatprep.subr.bf16.mxu0 0
    %271 = vmatpush1.bf16.msra.mxu0 0
    %272 = vmatprep.subr.bf16.mxu0 0
    %273 = vmatpush1.bf16.msra.mxu0 0
    %274 = vmatprep.subr.bf16.mxu0 0
    %275 = vmatpush1.bf16.msra.mxu0 0
    %276 = vmatprep.mubr.bf16.mxu0 0
    %277 = vmatmul.mubr.bf16.gmra.mrb[0].mxu0 %v172
    %v278 = vpop.f32.mrb[0].mxu0
    %v279 = vadd.f32 %v194, %v278
    %v280 = vpop.f32.mrb[0].mxu0
    %v281 = vpop.f32.mrb[0].mxu0
    %v282 = vadd.f32 %v194, %v281
    %v283 = vpop.f32.mrb[0].mxu0
    %284 = vdwg.mxu0
    %v285 = vmax.f32 %v279, 0.0
    %v286 = vmax.f32 %v282, 0.0
    %v287 = vld [vmem:[#allocation5] sm:$0xf]
    %v288 = vld [vmem:[#allocation5 + $0x4] sm:$0xf]
    %v289 = vpack.c.bf16 %v286, %v285
    %v292 = vunpack.c.l.b16 %v287
    %v293 = vunpack.c.l.b16 %v288
    %v294 = vpack.c.b16 %v293, %v292
    %vm295 = vcmask 130048
    %v297 = vsel %vm295, %v294, 0
    %299 = vmatprep.subr.bf16.mxu0 0
    %300 = vmatpush1.bf16.msra.mxu0 %v289
    %301 = vmatprep.subr.bf16.mxu0 0
    %302 = vmatpush1.bf16.msra.mxu0 0
    %303 = vmatprep.subr.bf16.mxu0 0
    %304 = vmatpush1.bf16.msra.mxu0 0
    %305 = vmatprep.subr.bf16.mxu0 0
    %306 = vmatpush1.bf16.msra.mxu0 0
    %307 = vmatprep.subr.bf16.mxu0 0
    %308 = vmatpush1.bf16.msra.mxu0 0
    %309 = vmatprep.subr.bf16.mxu0 0
    %310 = vmatpush1.bf16.msra.mxu0 0
    %311 = vmatprep.subr.bf16.mxu0 0
    %312 = vmatpush1.bf16.msra.mxu0 0
    %313 = vmatprep.subr.bf16.mxu0 0
    %314 = vmatpush1.bf16.msra.mxu0 0
    %315 = vmatprep.subr.bf16.mxu0 0
    %316 = vmatpush1.bf16.msra.mxu0 0
    %317 = vmatprep.subr.bf16.mxu0 0
    %318 = vmatpush1.bf16.msra.mxu0 0
    %319 = vmatprep.subr.bf16.mxu0 0
    %320 = vmatpush1.bf16.msra.mxu0 0
    %321 = vmatprep.subr.bf16.mxu0 0
    %322 = vmatpush1.bf16.msra.mxu0 0
    %323 = vmatprep.subr.bf16.mxu0 0
    %324 = vmatpush1.bf16.msra.mxu0 0
    %325 = vmatprep.subr.bf16.mxu0 0
    %326 = vmatpush1.bf16.msra.mxu0 0
    %327 = vmatprep.subr.bf16.mxu0 0
    %328 = vmatpush1.bf16.msra.mxu0 0
    %329 = vmatprep.subr.bf16.mxu0 0
    %330 = vmatpush1.bf16.msra.mxu0 0
    %331 = vmatprep.mubr.bf16.mxu0 0
    %332 = vmatmul.mubr.bf16.gmra.mrb[0].mxu0 %v297
    %v333 = vpop.f32.mrb[0].mxu0
    %v334 = vadd.f32 0.0, %v333
    %v335 = vpop.f32.mrb[0].mxu0
    %v336 = vpop.f32.mrb[0].mxu0
    %v337 = vadd.f32 0.0, %v336
    %v338 = vpop.f32.mrb[0].mxu0
    %339 = vdwg.mxu0
    %v340 = vpack.c.bf16 %v337, %v334
    %v341 = vld [vmem:[#allocation8] sm:$0xf]
    %v342 = vld [vmem:[#allocation8 + $0x4] sm:$0xf]
    %v343 = vld [vmem:[#allocation8 + $0x8] sm:$0xf]
    %v344 = vld [vmem:[#allocation8 + $0xc] sm:$0xf]
    %v345 = vld [vmem:[#allocation8 + $0x10] sm:$0xf]
    %v346 = vld [vmem:[#allocation8 + $0x14] sm:$0xf]
    %v347 = vld [vmem:[#allocation8 + $0x18] sm:$0xf]
    %v348 = vld [vmem:[#allocation8 + $0x1c] sm:$0xf]
    %v349 = vld [vmem:[#allocation8 + $0x20] sm:$0xf]
    %v350 = vld [vmem:[#allocation8 + $0x24] sm:$0xf]
    %v351 = vld [vmem:[#allocation8 + $0x28] sm:$0xf]
    %v352 = vld [vmem:[#allocation8 + $0x2c] sm:$0xf]
    %v353 = vld [vmem:[#allocation8 + $0x30] sm:$0xf]
    %v354 = vld [vmem:[#allocation8 + $0x34] sm:$0xf]
    %v355 = vld [vmem:[#allocation8 + $0x38] sm:$0xf]
    %v356 = vld [vmem:[#allocation8 + $0x3c] sm:$0xf]
    %v373 = vunpack.c.l.b16 %v341
    %v374 = vunpack.c.l.b16 %v342
    %v375 = vunpack.c.l.b16 %v343
    %v376 = vunpack.c.l.b16 %v344
    %v377 = vunpack.c.l.b16 %v345
    %v378 = vunpack.c.l.b16 %v346
    %v379 = vunpack.c.l.b16 %v347
    %v380 = vunpack.c.l.b16 %v348
    %v381 = vunpack.c.l.b16 %v349
    %v382 = vunpack.c.l.b16 %v350
    %v383 = vunpack.c.l.b16 %v351
    %v384 = vunpack.c.l.b16 %v352
    %v385 = vunpack.c.l.b16 %v353
    %v386 = vunpack.c.l.b16 %v354
    %v387 = vunpack.c.l.b16 %v355
    %v388 = vunpack.c.l.b16 %v356
    %v389 = vpack.c.b16 %v374, %v373
    %v390 = vpack.c.b16 %v376, %v375
    %v391 = vpack.c.b16 %v378, %v377
    %v392 = vpack.c.b16 %v380, %v379
    %v393 = vpack.c.b16 %v382, %v381
    %v394 = vpack.c.b16 %v384, %v383
    %v395 = vpack.c.b16 %v386, %v385
    %v396 = vpack.c.b16 %v388, %v387
    %405 = vmatprep.subr.bf16.mxu0 0
    %406 = vmatpush1.bf16.msra.mxu0 %v389
    %407 = vmatprep.subr.bf16.mxu0 0
    %408 = vmatpush1.bf16.msra.mxu0 %v390
    %409 = vmatprep.subr.bf16.mxu0 0
    %410 = vmatpush1.bf16.msra.mxu0 %v391
    %411 = vmatprep.subr.bf16.mxu0 0
    %412 = vmatpush1.bf16.msra.mxu0 %v392
    %413 = vmatprep.subr.bf16.mxu0 0
    %414 = vmatpush1.bf16.msra.mxu0 %v393
    %415 = vmatprep.subr.bf16.mxu0 0
    %416 = vmatpush1.bf16.msra.mxu0 %v394
    %417 = vmatprep.subr.bf16.mxu0 0
    %418 = vmatpush1.bf16.msra.mxu0 %v395
    %419 = vmatprep.subr.bf16.mxu0 0
    %420 = vmatpush1.bf16.msra.mxu0 %v396
    %421 = vmatprep.subr.bf16.mxu0 0
    %422 = vmatpush1.bf16.msra.mxu0 0
    %423 = vmatprep.subr.bf16.mxu0 0
    %424 = vmatpush1.bf16.msra.mxu0 0
    %425 = vmatprep.subr.bf16.mxu0 0
    %426 = vmatpush1.bf16.msra.mxu0 0
    %427 = vmatprep.subr.bf16.mxu0 0
    %428 = vmatpush1.bf16.msra.mxu0 0
    %429 = vmatprep.subr.bf16.mxu0 0
    %430 = vmatpush1.bf16.msra.mxu0 0
    %431 = vmatprep.subr.bf16.mxu0 0
    %432 = vmatpush1.bf16.msra.mxu0 0
    %433 = vmatprep.subr.bf16.mxu0 0
    %434 = vmatpush1.bf16.msra.mxu0 0
    %435 = vmatprep.subr.bf16.mxu0 0
    %436 = vmatpush1.bf16.msra.mxu0 0
    %437 = vmatprep.mubr.bf16.mxu0 0
    %438 = vmatmul.mubr.bf16.gmra.mrb[0].mxu0 %v340
    %v439 = vpop.f32.mrb[0].mxu0
    %v440 = vadd.f32 0.0, %v439
    %v441 = vpop.f32.mrb[0].mxu0
    %v442 = vpop.f32.mrb[0].mxu0
    %v443 = vadd.f32 0.0, %v442
    %v444 = vpop.f32.mrb[0].mxu0
    %445 = vdwg.mxu0
    %v446 = vadd.f32 %v440, %v443
    %v447 = vrot.slane %v446, 4
    %v448 = vadd.f32 %v446, %v447
    %v449 = vrot.slane %v448, 2
    %v450 = vadd.f32 %v448, %v449
    %v451 = vrot.slane %v450, 1
    %v452 = vadd.f32 %v450, %v451
    %v453 = vmul.f32 %v440, %v440
    %v454 = vmul.f32 %v443, %v443
    %v455 = vadd.f32 %v453, %v454
    %v456 = vrot.slane %v455, 4
    %v457 = vadd.f32 %v455, %v456
    %v458 = vrot.slane %v457, 2
    %v459 = vadd.f32 %v457, %v458
    %v460 = vrot.slane %v459, 1
    %v461 = vadd.f32 %v459, %v460
    %v462 = vmul.f32 %v452, 0.0625
    %v463 = vmul.f32 %v461, 0.0625
    %v464 = vmul.f32 %v462, %v462
    %v465 = vsub.f32 %v463, %v464
    %v466 = vsub.f32 %v440, %v462
    %v467 = vsub.f32 %v443, %v462
    %v468 = vadd.f32 %v465, 1e-05
    %v469 = vrsqrt.pop %v468
    %v470 = vmul.f32 %v466, %v469
    %v471 = vmul.f32 %v467, %v469
    %v472 = vld [vmem:[%s6] sm:$0x1]
    %v474 = vlaneseq
    %v475 = vshrl.u32 %v474, 7
    %v476 = vsub.s32 0, %v475
    %v477 = vrot.slane %v472, %v476
    %v479 = vmul.f32 %v470, %v477
    %v480 = vmul.f32 %v471, %v477
    %v481 = vld [vmem:[%s7] sm:$0x1]
    %v483 = vlaneseq
    %v484 = vshrl.u32 %v483, 7
    %v485 = vsub.s32 0, %v484
    %v486 = vrot.slane %v481, %v485
    %v488 = vadd.f32 %v479, %v486
    %v489 = vadd.f32 %v480, %v486
    %v490 = vmax.f32 %v488, 0.0
    %v491 = vmax.f32 %v489, 0.0
    %v492 = vpack.c.bf16 %v491, %v490
    %v493 = vld [vmem:[#allocation10] sm:$0xf]
    %v494 = vld [vmem:[#allocation10 + $0x4] sm:$0xf]
    %v495 = vld [vmem:[#allocation10 + $0x8] sm:$0xf]
    %v496 = vld [vmem:[#allocation10 + $0xc] sm:$0xf]
    %v497 = vld [vmem:[#allocation10 + $0x10] sm:$0xf]
    %v498 = vld [vmem:[#allocation10 + $0x14] sm:$0xf]
    %v499 = vld [vmem:[#allocation10 + $0x18] sm:$0xf]
    %v500 = vld [vmem:[#allocation10 + $0x1c] sm:$0xf]
    %v501 = vld [vmem:[#allocation10 + $0x20] sm:$0xf]
    %v502 = vld [vmem:[#allocation10 + $0x24] sm:$0xf]
    %v503 = vld [vmem:[#allocation10 + $0x28] sm:$0xf]
    %v504 = vld [vmem:[#allocation10 + $0x2c] sm:$0xf]
    %v505 = vld [vmem:[#allocation10 + $0x30] sm:$0xf]
    %v506 = vld [vmem:[#allocation10 + $0x34] sm:$0xf]
    %v507 = vld [vmem:[#allocation10 + $0x38] sm:$0xf]
    %v508 = vld [vmem:[#allocation10 + $0x3c] sm:$0xf]
    %v509 = vld [vmem:[%s9] sm:$0x1]
    %v511 = vlaneseq
    %v512 = vshrl.u32 %v511, 7
    %v513 = vsub.s32 0, %v512
    %v514 = vrot.slane %v509, %v513
    %v532 = vunpack.c.l.b16 %v493
    %v533 = vunpack.c.l.b16 %v494
    %v534 = vunpack.c.l.b16 %v495
    %v535 = vunpack.c.l.b16 %v496
    %v536 = vunpack.c.l.b16 %v497
    %v537 = vunpack.c.l.b16 %v498
    %v538 = vunpack.c.l.b16 %v499
    %v539 = vunpack.c.l.b16 %v500
    %v540 = vunpack.c.l.b16 %v501
    %v541 = vunpack.c.l.b16 %v502
    %v542 = vunpack.c.l.b16 %v503
    %v543 = vunpack.c.l.b16 %v504
    %v544 = vunpack.c.l.b16 %v505
    %v545 = vunpack.c.l.b16 %v506
    %v546 = vunpack.c.l.b16 %v507
    %v547 = vunpack.c.l.b16 %v508
    %v548 = vpack.c.b16 %v533, %v532
    %v549 = vpack.c.b16 %v535, %v534
    %v550 = vpack.c.b16 %v537, %v536
    %v551 = vpack.c.b16 %v539, %v538
    %v552 = vpack.c.b16 %v541, %v540
    %v553 = vpack.c.b16 %v543, %v542
    %v554 = vpack.c.b16 %v545, %v544
    %v555 = vpack.c.b16 %v547, %v546
    %564 = vmatprep.subr.bf16.mxu0 0
    %565 = vmatpush1.bf16.msra.mxu0 %v548
    %566 = vmatprep.subr.bf16.mxu0 0
    %567 = vmatpush1.bf16.msra.mxu0 %v549
    %568 = vmatprep.subr.bf16.mxu0 0
    %569 = vmatpush1.bf16.msra.mxu0 %v550
    %570 = vmatprep.subr.bf16.mxu0 0
    %571 = vmatpush1.bf16.msra.mxu0 %v551
    %572 = vmatprep.subr.bf16.mxu0 0
    %573 = vmatpush1.bf16.msra.mxu0 %v552
    %574 = vmatprep.subr.bf16.mxu0 0
    %575 = vmatpush1.bf16.msra.mxu0 %v553
    %576 = vmatprep.subr.bf16.mxu0 0
    %577 = vmatpush1.bf16.msra.mxu0 %v554
    %578 = vmatprep.subr.bf16.mxu0 0
    %579 = vmatpush1.bf16.msra.mxu0 %v555
    %580 = vmatprep.subr.bf16.mxu0 0
    %581 = vmatpush1.bf16.msra.mxu0 0
    %582 = vmatprep.subr.bf16.mxu0 0
    %583 = vmatpush1.bf16.msra.mxu0 0
    %584 = vmatprep.subr.bf16.mxu0 0
    %585 = vmatpush1.bf16.msra.mxu0 0
    %586 = vmatprep.subr.bf16.mxu0 0
    %587 = vmatpush1.bf16.msra.mxu0 0
    %588 = vmatprep.subr.bf16.mxu0 0
    %589 = vmatpush1.bf16.msra.mxu0 0
    %590 = vmatprep.subr.bf16.mxu0 0
    %591 = vmatpush1.bf16.msra.mxu0 0
    %592 = vmatprep.subr.bf16.mxu0 0
    %593 = vmatpush1.bf16.msra.mxu0 0
    %594 = vmatprep.subr.bf16.mxu0 0
    %595 = vmatpush1.bf16.msra.mxu0 0
    %596 = vmatprep.mubr.bf16.mxu0 0
    %597 = vmatmul.mubr.bf16.gmra.mrb[0].mxu0 %v492
    %v598 = vpop.f32.mrb[0].mxu0
    %v599 = vadd.f32 %v514, %v598
    %v600 = vpop.f32.mrb[0].mxu0
    %v601 = vpop.f32.mrb[0].mxu0
    %v602 = vadd.f32 %v514, %v601
    %v603 = vpop.f32.mrb[0].mxu0
    %604 = vdwg.mxu0
    %v605 = vmax.f32 %v599, 0.0
    %v606 = vmax.f32 %v602, 0.0
    %v607 = vpack.c.bf16 %v606, %v605
    %608 = vmatprep.subr.bf16.mxu0 0
    %609 = vmatpush1.bf16.msra.mxu0 %v607
    %610 = vmatprep.subr.bf16.mxu0 0
    %611 = vmatpush1.bf16.msra.mxu0 0
    %612 = vmatprep.subr.bf16.mxu0 0
    %613 = vmatpush1.bf16.msra.mxu0 0
    %614 = vmatprep.subr.bf16.mxu0 0
    %615 = vmatpush1.bf16.msra.mxu0 0
    %616 = vmatprep.subr.bf16.mxu0 0
    %617 = vmatpush1.bf16.msra.mxu0 0
    %618 = vmatprep.subr.bf16.mxu0 0
    %619 = vmatpush1.bf16.msra.mxu0 0
    %620 = vmatprep.subr.bf16.mxu0 0
    %621 = vmatpush1.bf16.msra.mxu0 0
    %622 = vmatprep.subr.bf16.mxu0 0
    %623 = vmatpush1.bf16.msra.mxu0 0
    %624 = vmatprep.subr.bf16.mxu0 0
    %625 = vmatpush1.bf16.msra.mxu0 0
    %626 = vmatprep.subr.bf16.mxu0 0
    %627 = vmatpush1.bf16.msra.mxu0 0
    %628 = vmatprep.subr.bf16.mxu0 0
    %629 = vmatpush1.bf16.msra.mxu0 0
    %630 = vmatprep.subr.bf16.mxu0 0
    %631 = vmatpush1.bf16.msra.mxu0 0
    %632 = vmatprep.subr.bf16.mxu0 0
    %633 = vmatpush1.bf16.msra.mxu0 0
    %634 = vmatprep.subr.bf16.mxu0 0
    %635 = vmatpush1.bf16.msra.mxu0 0
    %636 = vmatprep.subr.bf16.mxu0 0
    %637 = vmatpush1.bf16.msra.mxu0 0
    %638 = vmatprep.subr.bf16.mxu0 0
    %639 = vmatpush1.bf16.msra.mxu0 0
    %640 = vmatprep.mubr.bf16.mxu0 0
    %641 = vmatmul.mubr.bf16.gmra.mrb[0].mxu0 %v297
    %v642 = vpop.f32.mrb[0].mxu0
    %v643 = vadd.f32 0.0, %v642
    %v644 = vpop.f32.mrb[0].mxu0
    %v645 = vpop.f32.mrb[0].mxu0
    %v646 = vadd.f32 0.0, %v645
    %v647 = vpop.f32.mrb[0].mxu0
    %648 = vdwg.mxu0
    %v649 = vpack.c.bf16 %v646, %v643
    %s650 = scalar_lea.vmem [#allocation8], 64
    %v651 = vld [vmem:[%s650] sm:$0xf]
    %v652 = vld [vmem:[%s650 + $0x4] sm:$0xf]
    %v653 = vld [vmem:[%s650 + $0x8] sm:$0xf]
    %v654 = vld [vmem:[%s650 + $0xc] sm:$0xf]
    %v655 = vld [vmem:[%s650 + $0x10] sm:$0xf]
    %v656 = vld [vmem:[%s650 + $0x14] sm:$0xf]
    %v657 = vld [vmem:[%s650 + $0x18] sm:$0xf]
    %v658 = vld [vmem:[%s650 + $0x1c] sm:$0xf]
    %v659 = vld [vmem:[%s650 + $0x20] sm:$0xf]
    %v660 = vld [vmem:[%s650 + $0x24] sm:$0xf]
    %v661 = vld [vmem:[%s650 + $0x28] sm:$0xf]
    %v662 = vld [vmem:[%s650 + $0x2c] sm:$0xf]
    %v663 = vld [vmem:[%s650 + $0x30] sm:$0xf]
    %v664 = vld [vmem:[%s650 + $0x34] sm:$0xf]
    %v665 = vld [vmem:[%s650 + $0x38] sm:$0xf]
    %v666 = vld [vmem:[%s650 + $0x3c] sm:$0xf]
    %v683 = vunpack.c.l.b16 %v651
    %v684 = vunpack.c.l.b16 %v652
    %v685 = vunpack.c.l.b16 %v653
    %v686 = vunpack.c.l.b16 %v654
    %v687 = vunpack.c.l.b16 %v655
    %v688 = vunpack.c.l.b16 %v656
    %v689 = vunpack.c.l.b16 %v657
    %v690 = vunpack.c.l.b16 %v658
    %v691 = vunpack.c.l.b16 %v659
    %v692 = vunpack.c.l.b16 %v660
    %v693 = vunpack.c.l.b16 %v661
    %v694 = vunpack.c.l.b16 %v662
    %v695 = vunpack.c.l.b16 %v663
    %v696 = vunpack.c.l.b16 %v664
    %v697 = vunpack.c.l.b16 %v665
    %v698 = vunpack.c.l.b16 %v666
    %v699 = vpack.c.b16 %v684, %v683
    %v700 = vpack.c.b16 %v686, %v685
    %v701 = vpack.c.b16 %v688, %v687
    %v702 = vpack.c.b16 %v690, %v689
    %v703 = vpack.c.b16 %v692, %v691
    %v704 = vpack.c.b16 %v694, %v693
    %v705 = vpack.c.b16 %v696, %v695
    %v706 = vpack.c.b16 %v698, %v697
    %715 = vmatprep.subr.bf16.mxu0 0
    %716 = vmatpush1.bf16.msra.mxu0 %v699
    %717 = vmatprep.subr.bf16.mxu0 0
    %718 = vmatpush1.bf16.msra.mxu0 %v700
    %719 = vmatprep.subr.bf16.mxu0 0
    %720 = vmatpush1.bf16.msra.mxu0 %v701
    %721 = vmatprep.subr.bf16.mxu0 0
    %722 = vmatpush1.bf16.msra.mxu0 %v702
    %723 = vmatprep.subr.bf16.mxu0 0
    %724 = vmatpush1.bf16.msra.mxu0 %v703
    %725 = vmatprep.subr.bf16.mxu0 0
    %726 = vmatpush1.bf16.msra.mxu0 %v704
    %727 = vmatprep.subr.bf16.mxu0 0
    %728 = vmatpush1.bf16.msra.mxu0 %v705
    %729 = vmatprep.subr.bf16.mxu0 0
    %730 = vmatpush1.bf16.msra.mxu0 %v706
    %731 = vmatprep.subr.bf16.mxu0 0
    %732 = vmatpush1.bf16.msra.mxu0 0
    %733 = vmatprep.subr.bf16.mxu0 0
    %734 = vmatpush1.bf16.msra.mxu0 0
    %735 = vmatprep.subr.bf16.mxu0 0
    %736 = vmatpush1.bf16.msra.mxu0 0
    %737 = vmatprep.subr.bf16.mxu0 0
    %738 = vmatpush1.bf16.msra.mxu0 0
    %739 = vmatprep.subr.bf16.mxu0 0
    %740 = vmatpush1.bf16.msra.mxu0 0
    %741 = vmatprep.subr.bf16.mxu0 0
    %742 = vmatpush1.bf16.msra.mxu0 0
    %743 = vmatprep.subr.bf16.mxu0 0
    %744 = vmatpush1.bf16.msra.mxu0 0
    %745 = vmatprep.subr.bf16.mxu0 0
    %746 = vmatpush1.bf16.msra.mxu0 0
    %747 = vmatprep.mubr.bf16.mxu0 0
    %748 = vmatmul.mubr.bf16.gmra.mrb[0].mxu0 %v649
    %v749 = vpop.f32.mrb[0].mxu0
    %v750 = vadd.f32 0.0, %v749
    %v751 = vpop.f32.mrb[0].mxu0
    %v752 = vpop.f32.mrb[0].mxu0
    %v753 = vadd.f32 0.0, %v752
    %v754 = vpop.f32.mrb[0].mxu0
    %755 = vdwg.mxu0
    %v756 = vadd.f32 %v750, %v753
    %v757 = vrot.slane %v756, 4
    %v758 = vadd.f32 %v756, %v757
    %v759 = vrot.slane %v758, 2
    %v760 = vadd.f32 %v758, %v759
    %v761 = vrot.slane %v760, 1
    %v762 = vadd.f32 %v760, %v761
    %v763 = vmul.f32 %v750, %v750
    %v764 = vmul.f32 %v753, %v753
    %v765 = vadd.f32 %v763, %v764
    %v766 = vrot.slane %v765, 4
    %v767 = vadd.f32 %v765, %v766
    %v768 = vrot.slane %v767, 2
    %v769 = vadd.f32 %v767, %v768
    %v770 = vrot.slane %v769, 1
    %v771 = vadd.f32 %v769, %v770
    %v772 = vmul.f32 %v762, 0.0625
    %v773 = vmul.f32 %v771, 0.0625
    %v774 = vmul.f32 %v772, %v772
    %v775 = vsub.f32 %v773, %v774
    %v776 = vsub.f32 %v750, %v772
    %v777 = vsub.f32 %v753, %v772
    %v778 = vadd.f32 %v775, 1e-05
    %v779 = vrsqrt.pop %v778
    %v780 = vmul.f32 %v776, %v779
    %v781 = vmul.f32 %v777, %v779
    %s782 = scalar_lea.vmem %s6, 1
    %v783 = vld [vmem:[%s782] sm:$0x1]
    %v785 = vlaneseq
    %v786 = vshrl.u32 %v785, 7
    %v787 = vsub.s32 0, %v786
    %v788 = vrot.slane %v783, %v787
    %v790 = vmul.f32 %v780, %v788
    %v791 = vmul.f32 %v781, %v788
    %s792 = scalar_lea.vmem %s7, 1
    %v793 = vld [vmem:[%s792] sm:$0x1]
    %v795 = vlaneseq
    %v796 = vshrl.u32 %v795, 7
    %v797 = vsub.s32 0, %v796
    %v798 = vrot.slane %v793, %v797
    %v800 = vadd.f32 %v790, %v798
    %v801 = vadd.f32 %v791, %v798
    %v802 = vmax.f32 %v800, 0.0
    %v803 = vmax.f32 %v801, 0.0
    %v804 = vpack.c.bf16 %v803, %v802
    %s805 = scalar_lea.vmem [#allocation10], 64
    %v806 = vld [vmem:[%s805] sm:$0xf]
    %v807 = vld [vmem:[%s805 + $0x4] sm:$0xf]
    %v808 = vld [vmem:[%s805 + $0x8] sm:$0xf]
    %v809 = vld [vmem:[%s805 + $0xc] sm:$0xf]
    %v810 = vld [vmem:[%s805 + $0x10] sm:$0xf]
    %v811 = vld [vmem:[%s805 + $0x14] sm:$0xf]
    %v812 = vld [vmem:[%s805 + $0x18] sm:$0xf]
    %v813 = vld [vmem:[%s805 + $0x1c] sm:$0xf]
    %v814 = vld [vmem:[%s805 + $0x20] sm:$0xf]
    %v815 = vld [vmem:[%s805 + $0x24] sm:$0xf]
    %v816 = vld [vmem:[%s805 + $0x28] sm:$0xf]
    %v817 = vld [vmem:[%s805 + $0x2c] sm:$0xf]
    %v818 = vld [vmem:[%s805 + $0x30] sm:$0xf]
    %v819 = vld [vmem:[%s805 + $0x34] sm:$0xf]
    %v820 = vld [vmem:[%s805 + $0x38] sm:$0xf]
    %v821 = vld [vmem:[%s805 + $0x3c] sm:$0xf]
    %s822 = scalar_lea.vmem %s9, 1
    %v823 = vld [vmem:[%s822] sm:$0x1]
    %v825 = vlaneseq
    %v826 = vshrl.u32 %v825, 7
    %v827 = vsub.s32 0, %v826
    %v828 = vrot.slane %v823, %v827
    %v846 = vunpack.c.l.b16 %v806
    %v847 = vunpack.c.l.b16 %v807
    %v848 = vunpack.c.l.b16 %v808
    %v849 = vunpack.c.l.b16 %v809
    %v850 = vunpack.c.l.b16 %v810
    %v851 = vunpack.c.l.b16 %v811
    %v852 = vunpack.c.l.b16 %v812
    %v853 = vunpack.c.l.b16 %v813
    %v854 = vunpack.c.l.b16 %v814
    %v855 = vunpack.c.l.b16 %v815
    %v856 = vunpack.c.l.b16 %v816
    %v857 = vunpack.c.l.b16 %v817
    %v858 = vunpack.c.l.b16 %v818
    %v859 = vunpack.c.l.b16 %v819
    %v860 = vunpack.c.l.b16 %v820
    %v861 = vunpack.c.l.b16 %v821
    %v862 = vpack.c.b16 %v847, %v846
    %v863 = vpack.c.b16 %v849, %v848
    %v864 = vpack.c.b16 %v851, %v850
    %v865 = vpack.c.b16 %v853, %v852
    %v866 = vpack.c.b16 %v855, %v854
    %v867 = vpack.c.b16 %v857, %v856
    %v868 = vpack.c.b16 %v859, %v858
    %v869 = vpack.c.b16 %v861, %v860
    %878 = vmatprep.subr.bf16.mxu0 0
    %879 = vmatpush1.bf16.msra.mxu0 %v862
    %880 = vmatprep.subr.bf16.mxu0 0
    %881 = vmatpush1.bf16.msra.mxu0 %v863
    %882 = vmatprep.subr.bf16.mxu0 0
    %883 = vmatpush1.bf16.msra.mxu0 %v864
    %884 = vmatprep.subr.bf16.mxu0 0
    %885 = vmatpush1.bf16.msra.mxu0 %v865
    %886 = vmatprep.subr.bf16.mxu0 0
    %887 = vmatpush1.bf16.msra.mxu0 %v866
    %888 = vmatprep.subr.bf16.mxu0 0
    %889 = vmatpush1.bf16.msra.mxu0 %v867
    %890 = vmatprep.subr.bf16.mxu0 0
    %891 = vmatpush1.bf16.msra.mxu0 %v868
    %892 = vmatprep.subr.bf16.mxu0 0
    %893 = vmatpush1.bf16.msra.mxu0 %v869
    %894 = vmatprep.subr.bf16.mxu0 0
    %895 = vmatpush1.bf16.msra.mxu0 0
    %896 = vmatprep.subr.bf16.mxu0 0
    %897 = vmatpush1.bf16.msra.mxu0 0
    %898 = vmatprep.subr.bf16.mxu0 0
    %899 = vmatpush1.bf16.msra.mxu0 0
    %900 = vmatprep.subr.bf16.mxu0 0
    %901 = vmatpush1.bf16.msra.mxu0 0
    %902 = vmatprep.subr.bf16.mxu0 0
    %903 = vmatpush1.bf16.msra.mxu0 0
    %904 = vmatprep.subr.bf16.mxu0 0
    %905 = vmatpush1.bf16.msra.mxu0 0
    %906 = vmatprep.subr.bf16.mxu0 0
    %907 = vmatpush1.bf16.msra.mxu0 0
    %908 = vmatprep.subr.bf16.mxu0 0
    %909 = vmatpush1.bf16.msra.mxu0 0
    %910 = vmatprep.mubr.bf16.mxu0 0
    %911 = vmatmul.mubr.bf16.gmra.mrb[0].mxu0 %v804
    %v912 = vpop.f32.mrb[0].mxu0
    %v913 = vadd.f32 %v828, %v912
    %v914 = vpop.f32.mrb[0].mxu0
    %v915 = vpop.f32.mrb[0].mxu0
    %v916 = vadd.f32 %v828, %v915
    %v917 = vpop.f32.mrb[0].mxu0
    %918 = vdwg.mxu0
    %v919 = vmax.f32 %v913, 0.0
    %v920 = vmax.f32 %v916, 0.0
    %v921 = vpack.c.bf16 %v920, %v919
    %922 = vmatprep.subr.bf16.mxu0 0
    %923 = vmatpush1.bf16.msra.mxu0 %v921
    %924 = vmatprep.subr.bf16.mxu0 0
    %925 = vmatpush1.bf16.msra.mxu0 0
    %926 = vmatprep.subr.bf16.mxu0 0
    %927 = vmatpush1.bf16.msra.mxu0 0
    %928 = vmatprep.subr.bf16.mxu0 0
    %929 = vmatpush1.bf16.msra.mxu0 0
    %930 = vmatprep.subr.bf16.mxu0 0
    %931 = vmatpush1.bf16.msra.mxu0 0
    %932 = vmatprep.subr.bf16.mxu0 0
    %933 = vmatpush1.bf16.msra.mxu0 0
    %934 = vmatprep.subr.bf16.mxu0 0
    %935 = vmatpush1.bf16.msra.mxu0 0
    %936 = vmatprep.subr.bf16.mxu0 0
    %937 = vmatpush1.bf16.msra.mxu0 0
    %938 = vmatprep.subr.bf16.mxu0 0
    %939 = vmatpush1.bf16.msra.mxu0 0
    %940 = vmatprep.subr.bf16.mxu0 0
    %941 = vmatpush1.bf16.msra.mxu0 0
    %942 = vmatprep.subr.bf16.mxu0 0
    %943 = vmatpush1.bf16.msra.mxu0 0
    %944 = vmatprep.subr.bf16.mxu0 0
    %945 = vmatpush1.bf16.msra.mxu0 0
    %946 = vmatprep.subr.bf16.mxu0 0
    %947 = vmatpush1.bf16.msra.mxu0 0
    %948 = vmatprep.subr.bf16.mxu0 0
    %949 = vmatpush1.bf16.msra.mxu0 0
    %950 = vmatprep.subr.bf16.mxu0 0
    %951 = vmatpush1.bf16.msra.mxu0 0
    %952 = vmatprep.subr.bf16.mxu0 0
    %953 = vmatpush1.bf16.msra.mxu0 0
    %954 = vmatprep.mubr.bf16.mxu0 0
    %955 = vmatmul.mubr.bf16.gmra.mrb[0].mxu0 %v297
    %v956 = vpop.f32.mrb[0].mxu0
    %v957 = vadd.f32 0.0, %v956
    %v958 = vpop.f32.mrb[0].mxu0
    %v959 = vpop.f32.mrb[0].mxu0
    %v960 = vadd.f32 0.0, %v959
    %v961 = vpop.f32.mrb[0].mxu0
    %962 = vdwg.mxu0
    %v963 = vpack.c.bf16 %v960, %v957
    %s964 = scalar_lea.vmem [#allocation8], 128
    %v965 = vld [vmem:[%s964] sm:$0xf]
    %v966 = vld [vmem:[%s964 + $0x4] sm:$0xf]
    %v967 = vld [vmem:[%s964 + $0x8] sm:$0xf]
    %v968 = vld [vmem:[%s964 + $0xc] sm:$0xf]
    %v969 = vld [vmem:[%s964 + $0x10] sm:$0xf]
    %v970 = vld [vmem:[%s964 + $0x14] sm:$0xf]
    %v971 = vld [vmem:[%s964 + $0x18] sm:$0xf]
    %v972 = vld [vmem:[%s964 + $0x1c] sm:$0xf]
    %v973 = vld [vmem:[%s964 + $0x20] sm:$0xf]
    %v974 = vld [vmem:[%s964 + $0x24] sm:$0xf]
    %v975 = vld [vmem:[%s964 + $0x28] sm:$0xf]
    %v976 = vld [vmem:[%s964 + $0x2c] sm:$0xf]
    %v977 = vld [vmem:[%s964 + $0x30] sm:$0xf]
    %v978 = vld [vmem:[%s964 + $0x34] sm:$0xf]
    %v979 = vld [vmem:[%s964 + $0x38] sm:$0xf]
    %v980 = vld [vmem:[%s964 + $0x3c] sm:$0xf]
    %v997 = vunpack.c.l.b16 %v965
    %v998 = vunpack.c.l.b16 %v966
    %v999 = vunpack.c.l.b16 %v967
    %v1000 = vunpack.c.l.b16 %v968
    %v1001 = vunpack.c.l.b16 %v969
    %v1002 = vunpack.c.l.b16 %v970
    %v1003 = vunpack.c.l.b16 %v971
    %v1004 = vunpack.c.l.b16 %v972
    %v1005 = vunpack.c.l.b16 %v973
    %v1006 = vunpack.c.l.b16 %v974
    %v1007 = vunpack.c.l.b16 %v975
    %v1008 = vunpack.c.l.b16 %v976
    %v1009 = vunpack.c.l.b16 %v977
    %v1010 = vunpack.c.l.b16 %v978
    %v1011 = vunpack.c.l.b16 %v979
    %v1012 = vunpack.c.l.b16 %v980
    %v1013 = vpack.c.b16 %v998, %v997
    %v1014 = vpack.c.b16 %v1000, %v999
    %v1015 = vpack.c.b16 %v1002, %v1001
    %v1016 = vpack.c.b16 %v1004, %v1003
    %v1017 = vpack.c.b16 %v1006, %v1005
    %v1018 = vpack.c.b16 %v1008, %v1007
    %v1019 = vpack.c.b16 %v1010, %v1009
    %v1020 = vpack.c.b16 %v1012, %v1011
    %1029 = vmatprep.subr.bf16.mxu0 0
    %1030 = vmatpush1.bf16.msra.mxu0 %v1013
    %1031 = vmatprep.subr.bf16.mxu0 0
    %1032 = vmatpush1.bf16.msra.mxu0 %v1014
    %1033 = vmatprep.subr.bf16.mxu0 0
    %1034 = vmatpush1.bf16.msra.mxu0 %v1015
    %1035 = vmatprep.subr.bf16.mxu0 0
    %1036 = vmatpush1.bf16.msra.mxu0 %v1016
    %1037 = vmatprep.subr.bf16.mxu0 0
    %1038 = vmatpush1.bf16.msra.mxu0 %v1017
    %1039 = vmatprep.subr.bf16.mxu0 0
    %1040 = vmatpush1.bf16.msra.mxu0 %v1018
    %1041 = vmatprep.subr.bf16.mxu0 0
    %1042 = vmatpush1.bf16.msra.mxu0 %v1019
    %1043 = vmatprep.subr.bf16.mxu0 0
    %1044 = vmatpush1.bf16.msra.mxu0 %v1020
    %1045 = vmatprep.subr.bf16.mxu0 0
    %1046 = vmatpush1.bf16.msra.mxu0 0
    %1047 = vmatprep.subr.bf16.mxu0 0
    %1048 = vmatpush1.bf16.msra.mxu0 0
    %1049 = vmatprep.subr.bf16.mxu0 0
    %1050 = vmatpush1.bf16.msra.mxu0 0
    %1051 = vmatprep.subr.bf16.mxu0 0
    %1052 = vmatpush1.bf16.msra.mxu0 0
    %1053 = vmatprep.subr.bf16.mxu0 0
    %1054 = vmatpush1.bf16.msra.mxu0 0
    %1055 = vmatprep.subr.bf16.mxu0 0
    %1056 = vmatpush1.bf16.msra.mxu0 0
    %1057 = vmatprep.subr.bf16.mxu0 0
    %1058 = vmatpush1.bf16.msra.mxu0 0
    %1059 = vmatprep.subr.bf16.mxu0 0
    %1060 = vmatpush1.bf16.msra.mxu0 0
    %1061 = vmatprep.mubr.bf16.mxu0 0
    %1062 = vmatmul.mubr.bf16.gmra.mrb[0].mxu0 %v963
    %v1063 = vpop.f32.mrb[0].mxu0
    %v1064 = vadd.f32 0.0, %v1063
    %v1065 = vpop.f32.mrb[0].mxu0
    %v1066 = vpop.f32.mrb[0].mxu0
    %v1067 = vadd.f32 0.0, %v1066
    %v1068 = vpop.f32.mrb[0].mxu0
    %1069 = vdwg.mxu0
    %v1070 = vadd.f32 %v1064, %v1067
    %v1071 = vrot.slane %v1070, 4
    %v1072 = vadd.f32 %v1070, %v1071
    %v1073 = vrot.slane %v1072, 2
    %v1074 = vadd.f32 %v1072, %v1073
    %v1075 = vrot.slane %v1074, 1
    %v1076 = vadd.f32 %v1074, %v1075
    %v1077 = vmul.f32 %v1064, %v1064
    %v1078 = vmul.f32 %v1067, %v1067
    %v1079 = vadd.f32 %v1077, %v1078
    %v1080 = vrot.slane %v1079, 4
    %v1081 = vadd.f32 %v1079, %v1080
    %v1082 = vrot.slane %v1081, 2
    %v1083 = vadd.f32 %v1081, %v1082
    %v1084 = vrot.slane %v1083, 1
    %v1085 = vadd.f32 %v1083, %v1084
    %v1086 = vmul.f32 %v1076, 0.0625
    %v1087 = vmul.f32 %v1085, 0.0625
    %v1088 = vmul.f32 %v1086, %v1086
    %v1089 = vsub.f32 %v1087, %v1088
    %v1090 = vsub.f32 %v1064, %v1086
    %v1091 = vsub.f32 %v1067, %v1086
    %v1092 = vadd.f32 %v1089, 1e-05
    %v1093 = vrsqrt.pop %v1092
    %v1094 = vmul.f32 %v1090, %v1093
    %v1095 = vmul.f32 %v1091, %v1093
    %s1096 = scalar_lea.vmem %s6, 2
    %v1097 = vld [vmem:[%s1096] sm:$0x1]
    %v1099 = vlaneseq
    %v1100 = vshrl.u32 %v1099, 7
    %v1101 = vsub.s32 0, %v1100
    %v1102 = vrot.slane %v1097, %v1101
    %v1104 = vmul.f32 %v1094, %v1102
    %v1105 = vmul.f32 %v1095, %v1102
    %s1106 = scalar_lea.vmem %s7, 2
    %v1107 = vld [vmem:[%s1106] sm:$0x1]
    %v1109 = vlaneseq
    %v1110 = vshrl.u32 %v1109, 7
    %v1111 = vsub.s32 0, %v1110
    %v1112 = vrot.slane %v1107, %v1111
    %v1114 = vadd.f32 %v1104, %v1112
    %v1115 = vadd.f32 %v1105, %v1112
    %v1116 = vmax.f32 %v1114, 0.0
    %v1117 = vmax.f32 %v1115, 0.0
    %v1118 = vpack.c.bf16 %v1117, %v1116
    %s1119 = scalar_lea.vmem [#allocation10], 128
    %v1120 = vld [vmem:[%s1119] sm:$0xf]
    %v1121 = vld [vmem:[%s1119 + $0x4] sm:$0xf]
    %v1122 = vld [vmem:[%s1119 + $0x8] sm:$0xf]
    %v1123 = vld [vmem:[%s1119 + $0xc] sm:$0xf]
    %v1124 = vld [vmem:[%s1119 + $0x10] sm:$0xf]
    %v1125 = vld [vmem:[%s1119 + $0x14] sm:$0xf]
    %v1126 = vld [vmem:[%s1119 + $0x18] sm:$0xf]
    %v1127 = vld [vmem:[%s1119 + $0x1c] sm:$0xf]
    %v1128 = vld [vmem:[%s1119 + $0x20] sm:$0xf]
    %v1129 = vld [vmem:[%s1119 + $0x24] sm:$0xf]
    %v1130 = vld [vmem:[%s1119 + $0x28] sm:$0xf]
    %v1131 = vld [vmem:[%s1119 + $0x2c] sm:$0xf]
    %v1132 = vld [vmem:[%s1119 + $0x30] sm:$0xf]
    %v1133 = vld [vmem:[%s1119 + $0x34] sm:$0xf]
    %v1134 = vld [vmem:[%s1119 + $0x38] sm:$0xf]
    %v1135 = vld [vmem:[%s1119 + $0x3c] sm:$0xf]
    %s1136 = scalar_lea.vmem %s9, 2
    %v1137 = vld [vmem:[%s1136] sm:$0x1]
    %v1139 = vlaneseq
    %v1140 = vshrl.u32 %v1139, 7
    %v1141 = vsub.s32 0, %v1140
    %v1142 = vrot.slane %v1137, %v1141
    %v1160 = vunpack.c.l.b16 %v1120
    %v1161 = vunpack.c.l.b16 %v1121
    %v1162 = vunpack.c.l.b16 %v1122
    %v1163 = vunpack.c.l.b16 %v1123
    %v1164 = vunpack.c.l.b16 %v1124
    %v1165 = vunpack.c.l.b16 %v1125
    %v1166 = vunpack.c.l.b16 %v1126
    %v1167 = vunpack.c.l.b16 %v1127
    %v1168 = vunpack.c.l.b16 %v1128
    %v1169 = vunpack.c.l.b16 %v1129
    %v1170 = vunpack.c.l.b16 %v1130
    %v1171 = vunpack.c.l.b16 %v1131
    %v1172 = vunpack.c.l.b16 %v1132
    %v1173 = vunpack.c.l.b16 %v1133
    %v1174 = vunpack.c.l.b16 %v1134
    %v1175 = vunpack.c.l.b16 %v1135
    %v1176 = vpack.c.b16 %v1161, %v1160
    %v1177 = vpack.c.b16 %v1163, %v1162
    %v1178 = vpack.c.b16 %v1165, %v1164
    %v1179 = vpack.c.b16 %v1167, %v1166
    %v1180 = vpack.c.b16 %v1169, %v1168
    %v1181 = vpack.c.b16 %v1171, %v1170
    %v1182 = vpack.c.b16 %v1173, %v1172
    %v1183 = vpack.c.b16 %v1175, %v1174
    %1192 = vmatprep.subr.bf16.mxu0 0
    %1193 = vmatpush1.bf16.msra.mxu0 %v1176
    %1194 = vmatprep.subr.bf16.mxu0 0
    %1195 = vmatpush1.bf16.msra.mxu0 %v1177
    %1196 = vmatprep.subr.bf16.mxu0 0
    %1197 = vmatpush1.bf16.msra.mxu0 %v1178
    %1198 = vmatprep.subr.bf16.mxu0 0
    %1199 = vmatpush1.bf16.msra.mxu0 %v1179
    %1200 = vmatprep.subr.bf16.mxu0 0
    %1201 = vmatpush1.bf16.msra.mxu0 %v1180
    %1202 = vmatprep.subr.bf16.mxu0 0
    %1203 = vmatpush1.bf16.msra.mxu0 %v1181
    %1204 = vmatprep.subr.bf16.mxu0 0
    %1205 = vmatpush1.bf16.msra.mxu0 %v1182
    %1206 = vmatprep.subr.bf16.mxu0 0
    %1207 = vmatpush1.bf16.msra.mxu0 %v1183
    %1208 = vmatprep.subr.bf16.mxu0 0
    %1209 = vmatpush1.bf16.msra.mxu0 0
    %1210 = vmatprep.subr.bf16.mxu0 0
    %1211 = vmatpush1.bf16.msra.mxu0 0
    %1212 = vmatprep.subr.bf16.mxu0 0
    %1213 = vmatpush1.bf16.msra.mxu0 0
    %1214 = vmatprep.subr.bf16.mxu0 0
    %1215 = vmatpush1.bf16.msra.mxu0 0
    %1216 = vmatprep.subr.bf16.mxu0 0
    %1217 = vmatpush1.bf16.msra.mxu0 0
    %1218 = vmatprep.subr.bf16.mxu0 0
    %1219 = vmatpush1.bf16.msra.mxu0 0
    %1220 = vmatprep.subr.bf16.mxu0 0
    %1221 = vmatpush1.bf16.msra.mxu0 0
    %1222 = vmatprep.subr.bf16.mxu0 0
    %1223 = vmatpush1.bf16.msra.mxu0 0
    %1224 = vmatprep.mubr.bf16.mxu0 0
    %1225 = vmatmul.mubr.bf16.gmra.mrb[0].mxu0 %v1118
    %v1226 = vpop.f32.mrb[0].mxu0
    %v1227 = vadd.f32 %v1142, %v1226
    %v1228 = vpop.f32.mrb[0].mxu0
    %v1229 = vpop.f32.mrb[0].mxu0
    %v1230 = vadd.f32 %v1142, %v1229
    %v1231 = vpop.f32.mrb[0].mxu0
    %1232 = vdwg.mxu0
    %v1233 = vmax.f32 %v1227, 0.0
    %v1234 = vmax.f32 %v1230, 0.0
    %v1235 = vld [vmem:[%s2] sm:$0x1]
    %v1236 = vpack.c.bf16 %v1234, %v1233
    %v1238 = vsel %vm295, %v1235, 0
    %1240 = vmatprep.subr.bf16.mxu0 0
    %1241 = vmatpush1.bf16.msra.mxu0 %v1236
    %1242 = vmatprep.subr.bf16.mxu0 0
    %1243 = vmatpush1.bf16.msra.mxu0 0
    %1244 = vmatprep.subr.bf16.mxu0 0
    %1245 = vmatpush1.bf16.msra.mxu0 0
    %1246 = vmatprep.subr.bf16.mxu0 0
    %1247 = vmatpush1.bf16.msra.mxu0 0
    %1248 = vmatprep.subr.bf16.mxu0 0
    %1249 = vmatpush1.bf16.msra.mxu0 0
    %1250 = vmatprep.subr.bf16.mxu0 0
    %1251 = vmatpush1.bf16.msra.mxu0 0
    %1252 = vmatprep.subr.bf16.mxu0 0
    %1253 = vmatpush1.bf16.msra.mxu0 0
    %1254 = vmatprep.subr.bf16.mxu0 0
    %1255 = vmatpush1.bf16.msra.mxu0 0
    %1256 = vmatprep.subr.bf16.mxu0 0
    %1257 = vmatpush1.bf16.msra.mxu0 0
    %1258 = vmatprep.subr.bf16.mxu0 0
    %1259 = vmatpush1.bf16.msra.mxu0 0
    %1260 = vmatprep.subr.bf16.mxu0 0
    %1261 = vmatpush1.bf16.msra.mxu0 0
    %1262 = vmatprep.subr.bf16.mxu0 0
    %1263 = vmatpush1.bf16.msra.mxu0 0
    %1264 = vmatprep.subr.bf16.mxu0 0
    %1265 = vmatpush1.bf16.msra.mxu0 0
    %1266 = vmatprep.subr.bf16.mxu0 0
    %1267 = vmatpush1.bf16.msra.mxu0 0
    %1268 = vmatprep.subr.bf16.mxu0 0
    %1269 = vmatpush1.bf16.msra.mxu0 0
    %1270 = vmatprep.subr.bf16.mxu0 0
    %1271 = vmatpush1.bf16.msra.mxu0 0
    %1272 = vmatprep.mubr.bf16.mxu0 0
    %1273 = vmatmul.mubr.bf16.gmra.mrb[0].mxu0 %v1238
    %v1274 = vpop.f32.mrb[0].mxu0
    %v1275 = vadd.f32 0.0, %v1274
    %v1276 = vpop.f32.mrb[0].mxu0
    %v1277 = vpop.f32.mrb[0].mxu0
    %v1278 = vpop.f32.mrb[0].mxu0
    %1279 = vdwg.mxu0
    %vm1280 = vcmask 1041408
    %v1281 = vsel %vm1280, %v1275, 0.0
    %v1282 = vrot.slane %v1281, 4
    %v1283 = vadd.f32 %v1281, %v1282
    %v1284 = vrot.slane %v1283, 2
    %v1285 = vadd.f32 %v1283, %v1284
    %v1286 = vrot.slane %v1285, 1
    %v1287 = vadd.f32 %v1285, %v1286
    %v1288 = vmul.f32 %v1275, %v1275
    %v1289 = vsel %vm1280, %v1288, 0.0
    %v1290 = vrot.slane %v1289, 4
    %v1291 = vadd.f32 %v1289, %v1290
    %v1292 = vrot.slane %v1291, 2
    %v1293 = vadd.f32 %v1291, %v1292
    %v1294 = vrot.slane %v1293, 1
    %v1295 = vadd.f32 %v1293, %v1294
    %v1296 = vmul.f32 %v1287, 0.5
    %v1297 = vmul.f32 %v1295, 0.5
    %v1298 = vmul.f32 %v1296, %v1296
    %v1299 = vsub.f32 %v1297, %v1298
    %v1300 = vsub.f32 %v1275, %v1296
    %v1301 = vadd.f32 %v1299, 1e-05
    %v1302 = vrsqrt.pop %v1301
    %v1303 = vmul.f32 %v1300, %v1302
    %v1304 = vpack.c.bf16 %v1303, %v1303
    %v1305 = vld [vmem:[#allocation11] sm:$0xf]
    %v1306 = vld [vmem:[#allocation11 + $0x4] sm:$0xf]
    %v1307 = vld [vmem:[#allocation11 + $0x8] sm:$0xf]
    %v1308 = vld [vmem:[#allocation11 + $0xc] sm:$0xf]
    %v1309 = vld [vmem:[#allocation11 + $0x10] sm:$0xf]
    %v1310 = vld [vmem:[#allocation11 + $0x14] sm:$0xf]
    %v1311 = vld [vmem:[#allocation11 + $0x18] sm:$0xf]
    %v1312 = vld [vmem:[#allocation11 + $0x1c] sm:$0xf]
    %v1313 = vld [vmem:[#allocation11 + $0x20] sm:$0xf]
    %v1314 = vld [vmem:[#allocation11 + $0x24] sm:$0xf]
    %v1315 = vld [vmem:[#allocation11 + $0x28] sm:$0xf]
    %v1316 = vld [vmem:[#allocation11 + $0x2c] sm:$0xf]
    %v1317 = vld [vmem:[#allocation11 + $0x30] sm:$0xf]
    %v1318 = vld [vmem:[#allocation11 + $0x34] sm:$0xf]
    %v1319 = vld [vmem:[#allocation11 + $0x38] sm:$0xf]
    %v1320 = vld [vmem:[#allocation11 + $0x3c] sm:$0xf]
    %v1321 = vld [vmem:[%s11] sm:$0x1]
    %v1323 = vlaneseq
    %v1324 = vshrl.u32 %v1323, 7
    %v1325 = vsub.s32 0, %v1324
    %v1326 = vrot.slane %v1321, %v1325
    %v1344 = vunpack.c.l.b16 %v1305
    %v1345 = vunpack.c.l.b16 %v1306
    %v1346 = vunpack.c.l.b16 %v1307
    %v1347 = vunpack.c.l.b16 %v1308
    %v1348 = vunpack.c.l.b16 %v1309
    %v1349 = vunpack.c.l.b16 %v1310
    %v1350 = vunpack.c.l.b16 %v1311
    %v1351 = vunpack.c.l.b16 %v1312
    %v1352 = vunpack.c.l.b16 %v1313
    %v1353 = vunpack.c.l.b16 %v1314
    %v1354 = vunpack.c.l.b16 %v1315
    %v1355 = vunpack.c.l.b16 %v1316
    %v1356 = vunpack.c.l.b16 %v1317
    %v1357 = vunpack.c.l.b16 %v1318
    %v1358 = vunpack.c.l.b16 %v1319
    %v1359 = vunpack.c.l.b16 %v1320
    %v1360 = vpack.c.b16 %v1345, %v1344
    %v1361 = vpack.c.b16 %v1347, %v1346
    %v1362 = vpack.c.b16 %v1349, %v1348
    %v1363 = vpack.c.b16 %v1351, %v1350
    %v1364 = vpack.c.b16 %v1353, %v1352
    %v1365 = vpack.c.b16 %v1355, %v1354
    %v1366 = vpack.c.b16 %v1357, %v1356
    %v1367 = vpack.c.b16 %v1359, %v1358
    %1376 = vmatprep.subr.bf16.mxu0 0
    %1377 = vmatpush1.bf16.msra.mxu0 %v1360
    %1378 = vmatprep.subr.bf16.mxu0 0
    %1379 = vmatpush1.bf16.msra.mxu0 %v1361
    %1380 = vmatprep.subr.bf16.mxu0 0
    %1381 = vmatpush1.bf16.msra.mxu0 %v1362
    %1382 = vmatprep.subr.bf16.mxu0 0
    %1383 = vmatpush1.bf16.msra.mxu0 %v1363
    %1384 = vmatprep.subr.bf16.mxu0 0
    %1385 = vmatpush1.bf16.msra.mxu0 %v1364
    %1386 = vmatprep.subr.bf16.mxu0 0
    %1387 = vmatpush1.bf16.msra.mxu0 %v1365
    %1388 = vmatprep.subr.bf16.mxu0 0
    %1389 = vmatpush1.bf16.msra.mxu0 %v1366
    %1390 = vmatprep.subr.bf16.mxu0 0
    %1391 = vmatpush1.bf16.msra.mxu0 %v1367
    %1392 = vmatprep.subr.bf16.mxu0 0
    %1393 = vmatpush1.bf16.msra.mxu0 0
    %1394 = vmatprep.subr.bf16.mxu0 0
    %1395 = vmatpush1.bf16.msra.mxu0 0
    %1396 = vmatprep.subr.bf16.mxu0 0
    %1397 = vmatpush1.bf16.msra.mxu0 0
    %1398 = vmatprep.subr.bf16.mxu0 0
    %1399 = vmatpush1.bf16.msra.mxu0 0
    %1400 = vmatprep.subr.bf16.mxu0 0
    %1401 = vmatpush1.bf16.msra.mxu0 0
    %1402 = vmatprep.subr.bf16.mxu0 0
    %1403 = vmatpush1.bf16.msra.mxu0 0
    %1404 = vmatprep.subr.bf16.mxu0 0
    %1405 = vmatpush1.bf16.msra.mxu0 0
    %1406 = vmatprep.subr.bf16.mxu0 0
    %1407 = vmatpush1.bf16.msra.mxu0 0
    %1408 = vmatprep.mubr.bf16.mxu0 0
    %1409 = vmatmul.mubr.bf16.gmra.mrb[0].mxu0 %v1304
    %v1410 = vpop.f32.mrb[0].mxu0
    %v1411 = vadd.f32 %v1326, %v1410
    %v1412 = vpop.f32.mrb[0].mxu0
    %v1413 = vpop.f32.mrb[0].mxu0
    %v1414 = vpop.f32.mrb[0].mxu0
    %1415 = vdwg.mxu0
    %v1416 = vmax.f32 %v1411, 0.0
    %v1417 = vsel %vm1280, %v1416, 0.0
    %v1418 = vrot.slane %v1417, 4
    %v1419 = vadd.f32 %v1417, %v1418
    %v1420 = vrot.slane %v1419, 2
    %v1421 = vadd.f32 %v1419, %v1420
    %v1422 = vrot.slane %v1421, 1
    %v1423 = vadd.f32 %v1421, %v1422
    %v1424 = vmul.f32 %v1416, %v1416
    %v1425 = vsel %vm1280, %v1424, 0.0
    %v1426 = vrot.slane %v1425, 4
    %v1427 = vadd.f32 %v1425, %v1426
    %v1428 = vrot.slane %v1427, 2
    %v1429 = vadd.f32 %v1427, %v1428
    %v1430 = vrot.slane %v1429, 1
    %v1431 = vadd.f32 %v1429, %v1430
    %v1432 = vmul.f32 %v1423, 0.5
    %v1433 = vmul.f32 %v1431, 0.5
    %v1434 = vmul.f32 %v1432, %v1432
    %v1435 = vsub.f32 %v1433, %v1434
    %v1436 = vsub.f32 %v1416, %v1432
    %v1437 = vadd.f32 %v1435, 1e-05
    %v1438 = vrsqrt.pop %v1437
    %v1439 = vmul.f32 %v1436, %v1438
    %v1440 = vpack.c.bf16 %v1439, %v1439
    %v1441 = vld [vmem:[#allocation13] sm:$0xf]
    %v1442 = vld [vmem:[#allocation13 + $0x4] sm:$0xf]
    %v1443 = vld [vmem:[#allocation13 + $0x8] sm:$0xf]
    %v1444 = vld [vmem:[#allocation13 + $0xc] sm:$0xf]
    %v1445 = vld [vmem:[#allocation13 + $0x10] sm:$0xf]
    %v1446 = vld [vmem:[#allocation13 + $0x14] sm:$0xf]
    %v1447 = vld [vmem:[#allocation13 + $0x18] sm:$0xf]
    %v1448 = vld [vmem:[#allocation13 + $0x1c] sm:$0xf]
    %v1449 = vld [vmem:[#allocation13 + $0x20] sm:$0xf]
    %v1450 = vld [vmem:[#allocation13 + $0x24] sm:$0xf]
    %v1451 = vld [vmem:[#allocation13 + $0x28] sm:$0xf]
    %v1452 = vld [vmem:[#allocation13 + $0x2c] sm:$0xf]
    %v1453 = vld [vmem:[#allocation13 + $0x30] sm:$0xf]
    %v1454 = vld [vmem:[#allocation13 + $0x34] sm:$0xf]
    %v1455 = vld [vmem:[#allocation13 + $0x38] sm:$0xf]
    %v1456 = vld [vmem:[#allocation13 + $0x3c] sm:$0xf]
    %v1457 = vld [vmem:[%s13] sm:$0x1]
    %v1459 = vlaneseq
    %v1460 = vshrl.u32 %v1459, 7
    %v1461 = vsub.s32 0, %v1460
    %v1462 = vrot.slane %v1457, %v1461
    %v1480 = vunpack.c.l.b16 %v1441
    %v1481 = vunpack.c.l.b16 %v1442
    %v1482 = vunpack.c.l.b16 %v1443
    %v1483 = vunpack.c.l.b16 %v1444
    %v1484 = vunpack.c.l.b16 %v1445
    %v1485 = vunpack.c.l.b16 %v1446
    %v1486 = vunpack.c.l.b16 %v1447
    %v1487 = vunpack.c.l.b16 %v1448
    %v1488 = vunpack.c.l.b16 %v1449
    %v1489 = vunpack.c.l.b16 %v1450
    %v1490 = vunpack.c.l.b16 %v1451
    %v1491 = vunpack.c.l.b16 %v1452
    %v1492 = vunpack.c.l.b16 %v1453
    %v1493 = vunpack.c.l.b16 %v1454
    %v1494 = vunpack.c.l.b16 %v1455
    %v1495 = vunpack.c.l.b16 %v1456
    %v1496 = vpack.c.b16 %v1481, %v1480
    %v1497 = vpack.c.b16 %v1483, %v1482
    %v1498 = vpack.c.b16 %v1485, %v1484
    %v1499 = vpack.c.b16 %v1487, %v1486
    %v1500 = vpack.c.b16 %v1489, %v1488
    %v1501 = vpack.c.b16 %v1491, %v1490
    %v1502 = vpack.c.b16 %v1493, %v1492
    %v1503 = vpack.c.b16 %v1495, %v1494
    %1512 = vmatprep.subr.bf16.mxu0 0
    %1513 = vmatpush1.bf16.msra.mxu0 %v1496
    %1514 = vmatprep.subr.bf16.mxu0 0
    %1515 = vmatpush1.bf16.msra.mxu0 %v1497
    %1516 = vmatprep.subr.bf16.mxu0 0
    %1517 = vmatpush1.bf16.msra.mxu0 %v1498
    %1518 = vmatprep.subr.bf16.mxu0 0
    %1519 = vmatpush1.bf16.msra.mxu0 %v1499
    %1520 = vmatprep.subr.bf16.mxu0 0
    %1521 = vmatpush1.bf16.msra.mxu0 %v1500
    %1522 = vmatprep.subr.bf16.mxu0 0
    %1523 = vmatpush1.bf16.msra.mxu0 %v1501
    %1524 = vmatprep.subr.bf16.mxu0 0
    %1525 = vmatpush1.bf16.msra.mxu0 %v1502
    %1526 = vmatprep.subr.bf16.mxu0 0
    %1527 = vmatpush1.bf16.msra.mxu0 %v1503
    %1528 = vmatprep.subr.bf16.mxu0 0
    %1529 = vmatpush1.bf16.msra.mxu0 0
    %1530 = vmatprep.subr.bf16.mxu0 0
    %1531 = vmatpush1.bf16.msra.mxu0 0
    %1532 = vmatprep.subr.bf16.mxu0 0
    %1533 = vmatpush1.bf16.msra.mxu0 0
    %1534 = vmatprep.subr.bf16.mxu0 0
    %1535 = vmatpush1.bf16.msra.mxu0 0
    %1536 = vmatprep.subr.bf16.mxu0 0
    %1537 = vmatpush1.bf16.msra.mxu0 0
    %1538 = vmatprep.subr.bf16.mxu0 0
    %1539 = vmatpush1.bf16.msra.mxu0 0
    %1540 = vmatprep.subr.bf16.mxu0 0
    %1541 = vmatpush1.bf16.msra.mxu0 0
    %1542 = vmatprep.subr.bf16.mxu0 0
    %1543 = vmatpush1.bf16.msra.mxu0 0
    %1544 = vmatprep.mubr.bf16.mxu0 0
    %1545 = vmatmul.mubr.bf16.gmra.mrb[0].mxu0 %v1440
    %v1546 = vpop.f32.mrb[0].mxu0
    %v1547 = vadd.f32 %v1462, %v1546
    %v1548 = vpop.f32.mrb[0].mxu0
    %v1549 = vpop.f32.mrb[0].mxu0
    %v1550 = vpop.f32.mrb[0].mxu0
    %1551 = vdwg.mxu0
    %v1552 = vlaneseq
    %v1553 = vand.u32 %v1552, 127
    %vm1554 = vcmp.lt.s32.totalorder %v1553, 4
    %v1555 = vsel %vm1554, %v1547, -1e+30
    %v1556 = vsel %vm1280, %v1555, -inf
    %1557 = vmax.xlane.f32.xlu0 %v1556
    %v1558 = vpop.xlane.xlu0 %1557
    %v1559 = vsub.f32 %v1555, %v1558
    %v1560 = vmul.f32 %v1559, 1.442695
    %v1561 = vpow.pop %v1560
    %v1562 = vsel %vm1554, %v1561, 0.0
    %v1563 = vsel %vm1280, %v1562, 0.0
    %1564 = vadd.xlane.f32.xlu0 %v1563
    %v1565 = vpop.xlane.xlu0 %1564
    %v1566 = vlog2.pop %v1565
    %v1567 = vmul.f32 %v1566, 0.6931472
    %v1568 = vsub.f32 %v1559, %v1567
    %v1569 = vsel %vm1554, %v1568, 0.0
    %1570 = vst [vmem:[#allocation14] sm:$0x3] %v1569
    // Predicated region
    $region86: #{tpu_custom_call.1} parent=1 // pred_check
      _
    $region87: #{tpu_custom_call.1} parent=1 // pred_check_branch
      %1572 = sbr.rel (0) target = $region89
    $region88: #{tpu_custom_call.1} parent=1 // pred_region
      %s1574 = ssub.s32 32, 32
      %1575 = vsyncadd [#allocation4], %s1574
      %s1577 = sshll.u32 [#allocation14], 4
      %s1578 = int_to_ptr.vmem [resolvable:$true] %s1577
      %1580 = dma.vmem_to_hbm [thread:$0]  %s1578, 32, %s14, [#allocation4]
    $region89: #{tpu_custom_call.1} parent=1 // pred_fallthru
      _
    // Predicated region
    $region90: #{tpu_custom_call.1} parent=1 // pred_check
      _
    $region91: #{tpu_custom_call.1} parent=1 // pred_check_branch
      %1582 = sbr.rel (0) target = $region93
    $region92: #{tpu_custom_call.1} parent=1 // pred_region
      %1583 = dma.done [#allocation4], 32
    $region93: #{tpu_custom_call.1} parent=1 // pred_fallthru
      _
    %1584 = vsyncpa [#allocation3], 1
    %1585 = vsyncpa [#allocation6], 1
    %1586 = vsyncpa [#allocation9], 1
    %1587 = vsyncpa [#allocation12], 1
    %1588 = vsyncpa [#allocation4], 1

</llo_original>
